<compile_context>
chip_gen: v7x
topology: tpu7x:2x2x1
jax: 0.10.0
libtpu: 0.0.40
codegen_flags: <defaults>
</compile_context>

<pallas_src>
import jax
import jax.numpy as jnp
from jax.experimental import pallas as pl
from jax.experimental.pallas import tpu as pltpu  # noqa: F401  (TPU backend)

# ----------------------------- sizes ------------------------------------------
B = 2            # batch
C_IN = 3         # image channels
T = 4            # frames per clip
H_IMG = 16
W_IMG = 16
HW = H_IMG * W_IMG          # 256 spatial positions per frame
NF = T * B                  # 8 frames per call (row/lane-segment index = t*B + b)
C_MID = 8                   # backbone conv channels
F = 64                      # backbone feature dim (stand-in for _fc.in_features)
HH = F // 4                 # LSTM hidden size (= in_features // 4 in CLSTM) = 16
G2 = 2 * HH                 # 32  (bidirectional feature width)
G8 = 8 * HH                 # 128 (fused gate width, both directions)
N_CLASSES = 7
K_IM2COL = 9 * C_IN         # 27
K_PAD = 32                  # conv contraction dim zero-padded for clean bf16 tiles

# f32 parameter-slab row offsets (all multiples of 8 -> aligned sublane reads)
R_WPG = 0        # rows 0:8 feed fwd gates from pooled; rows 8:16 feed bwd gates
R_BG = 16        # fused input-projection bias (1, 128)
R_WHH = 24       # merged recurrent weights (32, 128)
R_BCONV = 56     # conv bias as a column (8, 1) in lane 0
R_ATTN = 64      # row 64: cols 0:32 attention weight, col 32 attention bias
R_WO = 72        # classifier weight (32, 128), cols >= N_CLASSES zero
R_BO = 104       # row 104: cols 0:N_CLASSES classifier bias
SLAB_ROWS = 112


# ----------------------------- fused CLSTM kernel ------------------------------
def _clstm_kernel(patches_ref, wconv_ref, slab_ref, out_ref):
    # ---- packed parameter views (static, sublane-aligned slices) ----
    w_pg_f = slab_ref[R_WPG:R_WPG + C_MID, :]                    # (8, 128)
    w_pg_b = slab_ref[R_WPG + C_MID:R_WPG + 2 * C_MID, :]        # (8, 128)
    b_g = slab_ref[R_BG:R_BG + 1, :]                             # (1, 128)
    whh = slab_ref[R_WHH:R_WHH + G2, :]                          # (32, 128)
    bconv = slab_ref[R_BCONV:R_BCONV + C_MID, :][:, 0:1]         # (8, 1)
    attn_row = slab_ref[R_ATTN:R_ATTN + 1, :]                    # (1, 128)
    wa = attn_row[:, 0:G2]                                       # (1, 32)
    ba = attn_row[:, G2:G2 + 1]                                  # (1, 1)
    wo = slab_ref[R_WO:R_WO + G2, :]                             # (32, 128)
    bo = slab_ref[R_BO:R_BO + 1, :]                              # (1, 128)

    # ---- backbone stand-in, lane-dense: bf16 conv matmul + swish + GAP ----
    conv = jnp.dot(wconv_ref[...], patches_ref[...],
                   preferred_element_type=jnp.float32)           # (C_MID, NF*HW) = (8, 2048)
    pre = conv + bconv                                           # lane-broadcast bias
    acti = pre * jax.nn.sigmoid(pre)                             # swish over 16 f32 vregs

    # Global average pool: per-frame lane-segment reductions (aligned 256-lane slices).
    pooled_cols = [jnp.sum(acti[:, n * HW:(n + 1) * HW], axis=-1, keepdims=True)
                   for n in range(NF)]                           # NF x (C_MID, 1)
    pooled_t = jnp.concatenate(pooled_cols, axis=1) * (1.0 / HW)  # (C_MID, NF)

    # (C_MID, NF) -> (NF, C_MID) flip done with VPU iota/mul/adds (avoids an XLU
    # relayout of a tiny, non-tile-aligned transpose).
    eye = (jax.lax.broadcasted_iota(jnp.int32, (C_MID, C_MID), 0)
           == jax.lax.broadcasted_iota(jnp.int32, (C_MID, C_MID), 1)
           ).astype(jnp.float32)
    pooled = jnp.sum(pooled_t[:, :, None] * eye[:, None, :], axis=0)   # (NF, C_MID)

    # Time-reversed frame order for the backward direction, hoisted out of the
    # recurrence so each unrolled step reads one contiguous row slice of gates_x.
    pooled_rev = jnp.concatenate(
        [pooled[(T - 1 - t) * B:(T - t) * B, :] for t in range(T)], axis=0)

    # Fused (backbone-linear o LSTM input projection), both directions, gate
    # columns interleaved [i_f,i_b | f_f,f_b | o_f,o_b | g_f,g_b].
    gates_x = (jnp.dot(pooled, w_pg_f, preferred_element_type=jnp.float32)
               + jnp.dot(pooled_rev, w_pg_b, preferred_element_type=jnp.float32)
               + b_g)                                            # (NF, 128)

    # ---- merged BiLSTM recurrence: ONE (B,32)x(32,128) matmul per step ----
    h = jnp.zeros((B, G2), jnp.float32)                          # [h_f | h_b]
    c = jnp.zeros((B, G2), jnp.float32)                          # [c_f | c_b]
    h_steps = []
    for s in range(T):                                           # T=4, fully unrolled
        gates = (gates_x[s * B:(s + 1) * B, :]
                 + jnp.dot(h, whh, preferred_element_type=jnp.float32))   # (B, 128)
        sig = jax.nn.sigmoid(gates[:, 0:3 * G2])                 # [i|f|o], both dirs
        i_g = sig[:, 0:G2]
        f_g = sig[:, G2:2 * G2]
        o_g = sig[:, 2 * G2:3 * G2]
        g_g = jnp.tanh(gates[:, 3 * G2:4 * G2])
        c = f_g * c + i_g * g_g
        h = o_g * jnp.tanh(c)
        h_steps.append(h)

    # Re-pair into per-frame outputs: frame t -> [h_fwd(step t) | h_bwd(step T-1-t)],
    # matching PyTorch's bidirectional LSTM output layout.
    h_all = jnp.concatenate(
        [jnp.concatenate([h_steps[t][:, 0:HH],
                          h_steps[T - 1 - t][:, HH:G2]], axis=1)
         for t in range(T)], axis=0)                             # (NF, 32)

    # ---- FAN 'self' attention: one reduce + one sigmoid over all frames ----
    scores = jnp.sum(h_all * wa, axis=-1, keepdims=True) + ba    # (NF, 1)
    alpha = jax.nn.sigmoid(scores)
    weighted = alpha * h_all
    num = weighted[0:B, :]
    den = alpha[0:B, :]
    for t in range(1, T):
        num = num + weighted[t * B:(t + 1) * B, :]
        den = den + alpha[t * B:(t + 1) * B, :]
    feat = num * pl.reciprocal(den, approx=True)                 # (B, 32)

    # ---- classifier (dropout p=0.2 is identity in eval mode) ----
    logits = jnp.dot(feat, wo, preferred_element_type=jnp.float32) + bo   # (B, 128)
    out_ref[...] = logits[:, 0:N_CLASSES]


# ----------------------------- wrapper ------------------------------------------
@jax.jit
def clstm_forward(x, packed):
    """x: (B, C, T, H, W) float32 (PyTorch layout)."""
    b, c, t, h, w = x.shape
    # Frame-major ordering (frame index = t*B + b) so LSTM time steps occupy
    # contiguous lane segments / row blocks everywhere downstream.
    xf = jnp.transpose(x, (2, 0, 3, 4, 1)).reshape(t * b, h, w, c)
    xf = jnp.pad(xf, ((0, 0), (1, 1), (1, 1), (0, 0)))           # pad=1 for the 3x3 conv
    taps = [xf[:, dy:dy + h, dx:dx + w, :] for dy in range(3) for dx in range(3)]
    pat = jnp.stack(taps, axis=0)                                # (9, NF, h, w, C)
    pat = jnp.transpose(pat, (0, 4, 1, 2, 3)).reshape(9 * c, t * b * h * w)
    patches = jnp.zeros((K_PAD, t * b * h * w), jnp.float32).at[:9 * c, :].set(pat)
    patches = patches.astype(jnp.bfloat16)                       # (32, 2048), lane-dense

    # Everything (< ~1 MiB live) fits in VMEM on v5e/v6e/v7x, so the whole forward
    # pass is one grid-less pallas_call (whole-array blocks, 3 inputs).
    # TODO(synk): if B*T/H/W are scaled up, add a "parallel" grid axis over frames
    #             for v7x's two TensorCores and re-derive tiles vs its 64 MiB VMEM.
    return pl.pallas_call(
        _clstm_kernel,
        out_shape=jax.ShapeDtypeStruct((b, N_CLASSES), jnp.float32),
    )(patches, packed["wconv_t"], packed["slab"])


# ----------------------------- parameter init & host-side packing ----------------
def init_params(key):
    ks = jax.random.split(key, 12)
    s = 0.1
    n = jax.random.normal
    return {
        # Backbone stand-in: conv3x3 (im2col rows ordered (dy, dx, c)) + swish +
        # GAP + linear to F features.
        "wconv": s * n(ks[0], (K_IM2COL, C_MID), jnp.float32),
        "bconv": s * n(ks[1], (C_MID,), jnp.float32),
        "wproj": s * n(ks[2], (C_MID, F), jnp.float32),
        "bproj": s * n(ks[3], (F,), jnp.float32),
        # BiLSTM, stored pre-transposed (in, 4*HH), gate column order [i, f, o, g];
        # bias = b_ih + b_hh.  (PyTorch stores [i, f, g, o] with separate biases:
        # importing real weights needs that column permutation + bias merge.)
        "wih_f": s * n(ks[4], (F, 4 * HH), jnp.float32),
        "wih_b": s * n(ks[5], (F, 4 * HH), jnp.float32),
        "bih_f": s * n(ks[6], (4 * HH,), jnp.float32),
        "bih_b": s * n(ks[7], (4 * HH,), jnp.float32),
        "whh_f": s * n(ks[8], (HH, 4 * HH), jnp.float32),
        "whh_b": s * n(ks[9], (HH, 4 * HH), jnp.float32),
        # FrameAttentionModule 'self': Linear(2*HH, 1) + sigmoid weighting.
        "wa": s * n(ks[10], (G2,), jnp.float32),
        "ba": jnp.zeros((), jnp.float32),
        # Classifier Linear(2*HH, n_classes).
        "wo": s * n(ks[11], (G2, N_CLASSES), jnp.float32),
        "bo": jnp.zeros((N_CLASSES,), jnp.float32),
    }


def _interleave_gates(mat_f, mat_b):
    """(rows, 4*HH) fwd & bwd blocks (gate order [i, f, o, g]) -> (rows, 8*HH)
    with columns [i_f, i_b, f_f, f_b, o_f, o_b, g_f, g_b]."""
    blocks = []
    for k in range(4):
        blocks.append(mat_f[:, k * HH:(k + 1) * HH])
        blocks.append(mat_b[:, k * HH:(k + 1) * HH])
    return jnp.concatenate(blocks, axis=1)


def pack_params(p):
    """Host-side fuse/permute/pack of the logical parameters into 2 dense kernel
    inputs: one bf16 conv weight and one (112, 128) f32 slab."""
    # Conv weight: transposed to (C_MID, K) and zero-padded to K_PAD, bf16.
    wconv_t = jnp.zeros((C_MID, K_PAD), jnp.float32)
    wconv_t = wconv_t.at[:, :K_IM2COL].set(p["wconv"].T).astype(jnp.bfloat16)

    # Fuse the backbone projection (wproj, bproj) into the LSTM input projection.
    z4 = jnp.zeros((C_MID, 4 * HH), jnp.float32)
    wpg_f = _interleave_gates(p["wproj"] @ p["wih_f"], z4)       # feeds fwd gate cols
    wpg_b = _interleave_gates(z4, p["wproj"] @ p["wih_b"])       # feeds bwd gate cols
    b_g = _interleave_gates((p["bproj"] @ p["wih_f"] + p["bih_f"])[None, :],
                            (p["bproj"] @ p["wih_b"] + p["bih_b"])[None, :])  # (1, 128)

    # Merged recurrent weight: rows 0:HH act on h_f (fwd gate cols only),
    # rows HH:2*HH act on h_b (bwd gate cols only).
    zh = jnp.zeros((HH, 4 * HH), jnp.float32)
    whh = jnp.concatenate([_interleave_gates(p["whh_f"], zh),
                           _interleave_gates(zh, p["whh_b"])], axis=0)        # (32, 128)

    slab = jnp.zeros((SLAB_ROWS, G8), jnp.float32)
    slab = slab.at[R_WPG:R_WPG + C_MID, :].set(wpg_f)
    slab = slab.at[R_WPG + C_MID:R_WPG + 2 * C_MID, :].set(wpg_b)
    slab = slab.at[R_BG, :].set(b_g[0])
    slab = slab.at[R_WHH:R_WHH + G2, :].set(whh)
    slab = slab.at[R_BCONV:R_BCONV + C_MID, 0].set(p["bconv"])
    slab = slab.at[R_ATTN, 0:G2].set(p["wa"])
    slab = slab.at[R_ATTN, G2].set(p["ba"])
    slab = slab.at[R_WO:R_WO + G2, 0:N_CLASSES].set(p["wo"])
    slab = slab.at[R_BO, 0:N_CLASSES].set(p["bo"])
    return {"wconv_t": wconv_t, "slab": slab}


if __name__ == "__main__":
    key = jax.random.PRNGKey(0)
    k_x, k_p = jax.random.split(key)
    x = jax.random.normal(k_x, (B, C_IN, T, H_IMG, W_IMG), jnp.float32)
    params = init_params(k_p)
    packed = pack_params(params)          # done once, outside the jitted forward

    logits = clstm_forward(x, packed)
    logits = jax.block_until_ready(logits)
    assert logits.shape == (B, N_CLASSES), logits.shape
    assert bool(jnp.all(jnp.isfinite(logits)))
    print("KERNEL_OK")
</pallas_src>

<mosaic_0001>
module attributes {stable_mosaic.version = 11 : i64} {
  func.func @_clstm_kernel(%arg0: memref<32x2048xbf16, #tpu.memory_space<vmem>>, %arg1: memref<8x32xbf16, #tpu.memory_space<vmem>>, %arg2: memref<112x128xf32, #tpu.memory_space<vmem>>, %arg3: memref<2x7xf32, #tpu.memory_space<vmem>>) attributes {dimension_semantics = [], scalar_prefetch = 0 : i64, scratch_operands = 0 : i64, tpu.core_type = #tpu.core_type<tc>} {
    %c0 = arith.constant 0 : index
    %c0_0 = arith.constant 0 : index
    %0 = vector.load %arg2[%c0, %c0_0] : memref<112x128xf32, #tpu.memory_space<vmem>>, vector<8x128xf32>
    %c8 = arith.constant 8 : index
    %c0_1 = arith.constant 0 : index
    %1 = vector.load %arg2[%c8, %c0_1] : memref<112x128xf32, #tpu.memory_space<vmem>>, vector<8x128xf32>
    %c16 = arith.constant 16 : index
    %c0_2 = arith.constant 0 : index
    %2 = vector.load %arg2[%c16, %c0_2] : memref<112x128xf32, #tpu.memory_space<vmem>>, vector<1x128xf32>
    %c24 = arith.constant 24 : index
    %c0_3 = arith.constant 0 : index
    %3 = vector.load %arg2[%c24, %c0_3] : memref<112x128xf32, #tpu.memory_space<vmem>>, vector<32x128xf32>
    %c56 = arith.constant 56 : index
    %c0_4 = arith.constant 0 : index
    %4 = vector.load %arg2[%c56, %c0_4] : memref<112x128xf32, #tpu.memory_space<vmem>>, vector<8x128xf32>
    %5 = vector.extract_strided_slice %4 {offsets = [0, 0], sizes = [8, 1], strides = [1, 1]} : vector<8x128xf32> to vector<8x1xf32>
    %c64 = arith.constant 64 : index
    %c0_5 = arith.constant 0 : index
    %6 = vector.load %arg2[%c64, %c0_5] : memref<112x128xf32, #tpu.memory_space<vmem>>, vector<1x128xf32>
    %7 = vector.extract_strided_slice %6 {offsets = [0, 0], sizes = [1, 32], strides = [1, 1]} : vector<1x128xf32> to vector<1x32xf32>
    %8 = vector.extract_strided_slice %6 {offsets = [0, 32], sizes = [1, 1], strides = [1, 1]} : vector<1x128xf32> to vector<1x1xf32>
    %c72 = arith.constant 72 : index
    %c0_6 = arith.constant 0 : index
    %9 = vector.load %arg2[%c72, %c0_6] : memref<112x128xf32, #tpu.memory_space<vmem>>, vector<32x128xf32>
    %c104 = arith.constant 104 : index
    %c0_7 = arith.constant 0 : index
    %10 = vector.load %arg2[%c104, %c0_7] : memref<112x128xf32, #tpu.memory_space<vmem>>, vector<1x128xf32>
    %c0_8 = arith.constant 0 : index
    %c0_9 = arith.constant 0 : index
    %11 = vector.load %arg1[%c0_8, %c0_9] : memref<8x32xbf16, #tpu.memory_space<vmem>>, vector<8x32xbf16>
    %c0_10 = arith.constant 0 : index
    %c0_11 = arith.constant 0 : index
    %12 = vector.load %arg0[%c0_10, %c0_11] : memref<32x2048xbf16, #tpu.memory_space<vmem>>, vector<32x2048xbf16>
    %cst = arith.constant dense<0.000000e+00> : vector<8x2048xf32>
    %13 = tpu.matmul %11, %12, %cst {dimension_numbers = #tpu.dot_dimension_numbers<[1], [0], [0], [1], [0, 0, 1, 1], [], []>} : vector<8x32xbf16>, vector<32x2048xbf16>, vector<8x2048xf32> -> vector<8x2048xf32>
    %14 = vector.broadcast %5 : vector<8x1xf32> to vector<8x2048xf32>
    %15 = arith.addf %13, %14 : vector<8x2048xf32>
    %16 = arith.negf %15 : vector<8x2048xf32>
    %17 = math.exp %16 : vector<8x2048xf32>
    %cst_12 = arith.constant 1.000000e+00 : f32
    %18 = vector.broadcast %cst_12 : f32 to vector<8x2048xf32>
    %19 = arith.addf %18, %17 : vector<8x2048xf32>
    %20 = arith.divf %18, %19 : vector<8x2048xf32>
    %21 = arith.mulf %15, %20 : vector<8x2048xf32>
    %22 = vector.extract_strided_slice %21 {offsets = [0, 0], sizes = [8, 256], strides = [1, 1]} : vector<8x2048xf32> to vector<8x256xf32>
    %cst_13 = arith.constant dense<0.000000e+00> : vector<8xf32>
    %23 = vector.multi_reduction <add>, %22, %cst_13 [1] : vector<8x256xf32> to vector<8xf32>
    %24 = vector.shape_cast %23 : vector<8xf32> to vector<8x1xf32>
    %25 = vector.extract_strided_slice %21 {offsets = [0, 256], sizes = [8, 256], strides = [1, 1]} : vector<8x2048xf32> to vector<8x256xf32>
    %cst_14 = arith.constant dense<0.000000e+00> : vector<8xf32>
    %26 = vector.multi_reduction <add>, %25, %cst_14 [1] : vector<8x256xf32> to vector<8xf32>
    %27 = vector.shape_cast %26 : vector<8xf32> to vector<8x1xf32>
    %28 = vector.extract_strided_slice %21 {offsets = [0, 512], sizes = [8, 256], strides = [1, 1]} : vector<8x2048xf32> to vector<8x256xf32>
    %cst_15 = arith.constant dense<0.000000e+00> : vector<8xf32>
    %29 = vector.multi_reduction <add>, %28, %cst_15 [1] : vector<8x256xf32> to vector<8xf32>
    %30 = vector.shape_cast %29 : vector<8xf32> to vector<8x1xf32>
    %31 = vector.extract_strided_slice %21 {offsets = [0, 768], sizes = [8, 256], strides = [1, 1]} : vector<8x2048xf32> to vector<8x256xf32>
    %cst_16 = arith.constant dense<0.000000e+00> : vector<8xf32>
    %32 = vector.multi_reduction <add>, %31, %cst_16 [1] : vector<8x256xf32> to vector<8xf32>
    %33 = vector.shape_cast %32 : vector<8xf32> to vector<8x1xf32>
    %34 = vector.extract_strided_slice %21 {offsets = [0, 1024], sizes = [8, 256], strides = [1, 1]} : vector<8x2048xf32> to vector<8x256xf32>
    %cst_17 = arith.constant dense<0.000000e+00> : vector<8xf32>
    %35 = vector.multi_reduction <add>, %34, %cst_17 [1] : vector<8x256xf32> to vector<8xf32>
    %36 = vector.shape_cast %35 : vector<8xf32> to vector<8x1xf32>
    %37 = vector.extract_strided_slice %21 {offsets = [0, 1280], sizes = [8, 256], strides = [1, 1]} : vector<8x2048xf32> to vector<8x256xf32>
    %cst_18 = arith.constant dense<0.000000e+00> : vector<8xf32>
    %38 = vector.multi_reduction <add>, %37, %cst_18 [1] : vector<8x256xf32> to vector<8xf32>
    %39 = vector.shape_cast %38 : vector<8xf32> to vector<8x1xf32>
    %40 = vector.extract_strided_slice %21 {offsets = [0, 1536], sizes = [8, 256], strides = [1, 1]} : vector<8x2048xf32> to vector<8x256xf32>
    %cst_19 = arith.constant dense<0.000000e+00> : vector<8xf32>
    %41 = vector.multi_reduction <add>, %40, %cst_19 [1] : vector<8x256xf32> to vector<8xf32>
    %42 = vector.shape_cast %41 : vector<8xf32> to vector<8x1xf32>
    %43 = vector.extract_strided_slice %21 {offsets = [0, 1792], sizes = [8, 256], strides = [1, 1]} : vector<8x2048xf32> to vector<8x256xf32>
    %cst_20 = arith.constant dense<0.000000e+00> : vector<8xf32>
    %44 = vector.multi_reduction <add>, %43, %cst_20 [1] : vector<8x256xf32> to vector<8xf32>
    %45 = vector.shape_cast %44 : vector<8xf32> to vector<8x1xf32>
    %46 = tpu.concatenate %24, %27, %30, %33, %36, %39, %42, %45 in 1 : vector<8x1xf32>, vector<8x1xf32>, vector<8x1xf32>, vector<8x1xf32>, vector<8x1xf32>, vector<8x1xf32>, vector<8x1xf32>, vector<8x1xf32> -> vector<8x8xf32>
    %cst_21 = arith.constant 3.906250e-03 : f32
    %47 = vector.broadcast %cst_21 : f32 to vector<8x8xf32>
    %48 = arith.mulf %46, %47 : vector<8x8xf32>
    %49 = tpu.iota {dimensions = array<i32: 0>} : vector<8x8xi32>
    %50 = tpu.iota {dimensions = array<i32: 1>} : vector<8x8xi32>
    %51 = arith.cmpi eq, %49, %50 : vector<8x8xi32>
    %52 = arith.extui %51 : vector<8x8xi1> to vector<8x8xi32>
    %53 = arith.sitofp %52 : vector<8x8xi32> to vector<8x8xf32>
    %54 = vector.shape_cast %48 : vector<8x8xf32> to vector<8x8x1xf32>
    %55 = vector.shape_cast %53 : vector<8x8xf32> to vector<8x1x8xf32>
    %56 = vector.broadcast %54 : vector<8x8x1xf32> to vector<8x8x8xf32>
    %57 = vector.broadcast %55 : vector<8x1x8xf32> to vector<8x8x8xf32>
    %58 = arith.mulf %56, %57 : vector<8x8x8xf32>
    %cst_22 = arith.constant dense<0.000000e+00> : vector<8x8xf32>
    %59 = vector.multi_reduction <add>, %58, %cst_22 [0] : vector<8x8x8xf32> to vector<8x8xf32>
    %60 = vector.extract_strided_slice %59 {offsets = [6, 0], sizes = [2, 8], strides = [1, 1]} : vector<8x8xf32> to vector<2x8xf32>
    %61 = vector.extract_strided_slice %59 {offsets = [4, 0], sizes = [2, 8], strides = [1, 1]} : vector<8x8xf32> to vector<2x8xf32>
    %62 = vector.extract_strided_slice %59 {offsets = [2, 0], sizes = [2, 8], strides = [1, 1]} : vector<8x8xf32> to vector<2x8xf32>
    %63 = vector.extract_strided_slice %59 {offsets = [0, 0], sizes = [2, 8], strides = [1, 1]} : vector<8x8xf32> to vector<2x8xf32>
    %64 = tpu.concatenate %60, %61, %62, %63 in 0 : vector<2x8xf32>, vector<2x8xf32>, vector<2x8xf32>, vector<2x8xf32> -> vector<8x8xf32>
    %cst_23 = arith.constant dense<0.000000e+00> : vector<8x128xf32>
    %65 = tpu.matmul %59, %0, %cst_23 {dimension_numbers = #tpu.dot_dimension_numbers<[1], [0], [0], [1], [0, 0, 1, 1], [], []>} : vector<8x8xf32>, vector<8x128xf32>, vector<8x128xf32> -> vector<8x128xf32>
    %cst_24 = arith.constant dense<0.000000e+00> : vector<8x128xf32>
    %66 = tpu.matmul %64, %1, %cst_24 {dimension_numbers = #tpu.dot_dimension_numbers<[1], [0], [0], [1], [0, 0, 1, 1], [], []>} : vector<8x8xf32>, vector<8x128xf32>, vector<8x128xf32> -> vector<8x128xf32>
    %67 = arith.addf %65, %66 : vector<8x128xf32>
    %68 = vector.broadcast %2 : vector<1x128xf32> to vector<8x128xf32>
    %69 = arith.addf %67, %68 : vector<8x128xf32>
    %cst_25 = arith.constant 0.000000e+00 : f32
    %70 = vector.broadcast %cst_25 : f32 to vector<2x32xf32>
    %cst_26 = arith.constant 0.000000e+00 : f32
    %71 = vector.broadcast %cst_26 : f32 to vector<2x32xf32>
    %72 = vector.extract_strided_slice %69 {offsets = [0, 0], sizes = [2, 128], strides = [1, 1]} : vector<8x128xf32> to vector<2x128xf32>
    %cst_27 = arith.constant dense<0.000000e+00> : vector<2x128xf32>
    %73 = tpu.matmul %70, %3, %cst_27 {dimension_numbers = #tpu.dot_dimension_numbers<[1], [0], [0], [1], [0, 0, 1, 1], [], []>} : vector<2x32xf32>, vector<32x128xf32>, vector<2x128xf32> -> vector<2x128xf32>
    %74 = arith.addf %72, %73 : vector<2x128xf32>
    %75 = vector.extract_strided_slice %74 {offsets = [0, 0], sizes = [2, 96], strides = [1, 1]} : vector<2x128xf32> to vector<2x96xf32>
    %76 = arith.negf %75 : vector<2x96xf32>
    %77 = math.exp %76 : vector<2x96xf32>
    %cst_28 = arith.constant 1.000000e+00 : f32
    %78 = vector.broadcast %cst_28 : f32 to vector<2x96xf32>
    %79 = arith.addf %78, %77 : vector<2x96xf32>
    %80 = arith.divf %78, %79 : vector<2x96xf32>
    %81 = vector.extract_strided_slice %80 {offsets = [0, 0], sizes = [2, 32], strides = [1, 1]} : vector<2x96xf32> to vector<2x32xf32>
    %82 = vector.extract_strided_slice %80 {offsets = [0, 32], sizes = [2, 32], strides = [1, 1]} : vector<2x96xf32> to vector<2x32xf32>
    %83 = vector.extract_strided_slice %80 {offsets = [0, 64], sizes = [2, 32], strides = [1, 1]} : vector<2x96xf32> to vector<2x32xf32>
    %84 = vector.extract_strided_slice %74 {offsets = [0, 96], sizes = [2, 32], strides = [1, 1]} : vector<2x128xf32> to vector<2x32xf32>
    %85 = math.tanh %84 : vector<2x32xf32>
    %86 = arith.mulf %82, %71 : vector<2x32xf32>
    %87 = arith.mulf %81, %85 : vector<2x32xf32>
    %88 = arith.addf %86, %87 : vector<2x32xf32>
    %89 = math.tanh %88 : vector<2x32xf32>
    %90 = arith.mulf %83, %89 : vector<2x32xf32>
    %91 = vector.extract_strided_slice %69 {offsets = [2, 0], sizes = [2, 128], strides = [1, 1]} : vector<8x128xf32> to vector<2x128xf32>
    %cst_29 = arith.constant dense<0.000000e+00> : vector<2x128xf32>
    %92 = tpu.matmul %90, %3, %cst_29 {dimension_numbers = #tpu.dot_dimension_numbers<[1], [0], [0], [1], [0, 0, 1, 1], [], []>} : vector<2x32xf32>, vector<32x128xf32>, vector<2x128xf32> -> vector<2x128xf32>
    %93 = arith.addf %91, %92 : vector<2x128xf32>
    %94 = vector.extract_strided_slice %93 {offsets = [0, 0], sizes = [2, 96], strides = [1, 1]} : vector<2x128xf32> to vector<2x96xf32>
    %95 = arith.negf %94 : vector<2x96xf32>
    %96 = math.exp %95 : vector<2x96xf32>
    %cst_30 = arith.constant 1.000000e+00 : f32
    %97 = vector.broadcast %cst_30 : f32 to vector<2x96xf32>
    %98 = arith.addf %97, %96 : vector<2x96xf32>
    %99 = arith.divf %97, %98 : vector<2x96xf32>
    %100 = vector.extract_strided_slice %99 {offsets = [0, 0], sizes = [2, 32], strides = [1, 1]} : vector<2x96xf32> to vector<2x32xf32>
    %101 = vector.extract_strided_slice %99 {offsets = [0, 32], sizes = [2, 32], strides = [1, 1]} : vector<2x96xf32> to vector<2x32xf32>
    %102 = vector.extract_strided_slice %99 {offsets = [0, 64], sizes = [2, 32], strides = [1, 1]} : vector<2x96xf32> to vector<2x32xf32>
    %103 = vector.extract_strided_slice %93 {offsets = [0, 96], sizes = [2, 32], strides = [1, 1]} : vector<2x128xf32> to vector<2x32xf32>
    %104 = math.tanh %103 : vector<2x32xf32>
    %105 = arith.mulf %101, %88 : vector<2x32xf32>
    %106 = arith.mulf %100, %104 : vector<2x32xf32>
    %107 = arith.addf %105, %106 : vector<2x32xf32>
    %108 = math.tanh %107 : vector<2x32xf32>
    %109 = arith.mulf %102, %108 : vector<2x32xf32>
    %110 = vector.extract_strided_slice %69 {offsets = [4, 0], sizes = [2, 128], strides = [1, 1]} : vector<8x128xf32> to vector<2x128xf32>
    %cst_31 = arith.constant dense<0.000000e+00> : vector<2x128xf32>
    %111 = tpu.matmul %109, %3, %cst_31 {dimension_numbers = #tpu.dot_dimension_numbers<[1], [0], [0], [1], [0, 0, 1, 1], [], []>} : vector<2x32xf32>, vector<32x128xf32>, vector<2x128xf32> -> vector<2x128xf32>
    %112 = arith.addf %110, %111 : vector<2x128xf32>
    %113 = vector.extract_strided_slice %112 {offsets = [0, 0], sizes = [2, 96], strides = [1, 1]} : vector<2x128xf32> to vector<2x96xf32>
    %114 = arith.negf %113 : vector<2x96xf32>
    %115 = math.exp %114 : vector<2x96xf32>
    %cst_32 = arith.constant 1.000000e+00 : f32
    %116 = vector.broadcast %cst_32 : f32 to vector<2x96xf32>
    %117 = arith.addf %116, %115 : vector<2x96xf32>
    %118 = arith.divf %116, %117 : vector<2x96xf32>
    %119 = vector.extract_strided_slice %118 {offsets = [0, 0], sizes = [2, 32], strides = [1, 1]} : vector<2x96xf32> to vector<2x32xf32>
    %120 = vector.extract_strided_slice %118 {offsets = [0, 32], sizes = [2, 32], strides = [1, 1]} : vector<2x96xf32> to vector<2x32xf32>
    %121 = vector.extract_strided_slice %118 {offsets = [0, 64], sizes = [2, 32], strides = [1, 1]} : vector<2x96xf32> to vector<2x32xf32>
    %122 = vector.extract_strided_slice %112 {offsets = [0, 96], sizes = [2, 32], strides = [1, 1]} : vector<2x128xf32> to vector<2x32xf32>
    %123 = math.tanh %122 : vector<2x32xf32>
    %124 = arith.mulf %120, %107 : vector<2x32xf32>
    %125 = arith.mulf %119, %123 : vector<2x32xf32>
    %126 = arith.addf %124, %125 : vector<2x32xf32>
    %127 = math.tanh %126 : vector<2x32xf32>
    %128 = arith.mulf %121, %127 : vector<2x32xf32>
    %129 = vector.extract_strided_slice %69 {offsets = [6, 0], sizes = [2, 128], strides = [1, 1]} : vector<8x128xf32> to vector<2x128xf32>
    %cst_33 = arith.constant dense<0.000000e+00> : vector<2x128xf32>
    %130 = tpu.matmul %128, %3, %cst_33 {dimension_numbers = #tpu.dot_dimension_numbers<[1], [0], [0], [1], [0, 0, 1, 1], [], []>} : vector<2x32xf32>, vector<32x128xf32>, vector<2x128xf32> -> vector<2x128xf32>
    %131 = arith.addf %129, %130 : vector<2x128xf32>
    %132 = vector.extract_strided_slice %131 {offsets = [0, 0], sizes = [2, 96], strides = [1, 1]} : vector<2x128xf32> to vector<2x96xf32>
    %133 = arith.negf %132 : vector<2x96xf32>
    %134 = math.exp %133 : vector<2x96xf32>
    %cst_34 = arith.constant 1.000000e+00 : f32
    %135 = vector.broadcast %cst_34 : f32 to vector<2x96xf32>
    %136 = arith.addf %135, %134 : vector<2x96xf32>
    %137 = arith.divf %135, %136 : vector<2x96xf32>
    %138 = vector.extract_strided_slice %137 {offsets = [0, 0], sizes = [2, 32], strides = [1, 1]} : vector<2x96xf32> to vector<2x32xf32>
    %139 = vector.extract_strided_slice %137 {offsets = [0, 32], sizes = [2, 32], strides = [1, 1]} : vector<2x96xf32> to vector<2x32xf32>
    %140 = vector.extract_strided_slice %137 {offsets = [0, 64], sizes = [2, 32], strides = [1, 1]} : vector<2x96xf32> to vector<2x32xf32>
    %141 = vector.extract_strided_slice %131 {offsets = [0, 96], sizes = [2, 32], strides = [1, 1]} : vector<2x128xf32> to vector<2x32xf32>
    %142 = math.tanh %141 : vector<2x32xf32>
    %143 = arith.mulf %139, %126 : vector<2x32xf32>
    %144 = arith.mulf %138, %142 : vector<2x32xf32>
    %145 = arith.addf %143, %144 : vector<2x32xf32>
    %146 = math.tanh %145 : vector<2x32xf32>
    %147 = arith.mulf %140, %146 : vector<2x32xf32>
    %148 = vector.extract_strided_slice %90 {offsets = [0, 0], sizes = [2, 16], strides = [1, 1]} : vector<2x32xf32> to vector<2x16xf32>
    %149 = vector.extract_strided_slice %147 {offsets = [0, 16], sizes = [2, 16], strides = [1, 1]} : vector<2x32xf32> to vector<2x16xf32>
    %150 = tpu.concatenate %148, %149 in 1 : vector<2x16xf32>, vector<2x16xf32> -> vector<2x32xf32>
    %151 = vector.extract_strided_slice %109 {offsets = [0, 0], sizes = [2, 16], strides = [1, 1]} : vector<2x32xf32> to vector<2x16xf32>
    %152 = vector.extract_strided_slice %128 {offsets = [0, 16], sizes = [2, 16], strides = [1, 1]} : vector<2x32xf32> to vector<2x16xf32>
    %153 = tpu.concatenate %151, %152 in 1 : vector<2x16xf32>, vector<2x16xf32> -> vector<2x32xf32>
    %154 = vector.extract_strided_slice %128 {offsets = [0, 0], sizes = [2, 16], strides = [1, 1]} : vector<2x32xf32> to vector<2x16xf32>
    %155 = vector.extract_strided_slice %109 {offsets = [0, 16], sizes = [2, 16], strides = [1, 1]} : vector<2x32xf32> to vector<2x16xf32>
    %156 = tpu.concatenate %154, %155 in 1 : vector<2x16xf32>, vector<2x16xf32> -> vector<2x32xf32>
    %157 = vector.extract_strided_slice %147 {offsets = [0, 0], sizes = [2, 16], strides = [1, 1]} : vector<2x32xf32> to vector<2x16xf32>
    %158 = vector.extract_strided_slice %90 {offsets = [0, 16], sizes = [2, 16], strides = [1, 1]} : vector<2x32xf32> to vector<2x16xf32>
    %159 = tpu.concatenate %157, %158 in 1 : vector<2x16xf32>, vector<2x16xf32> -> vector<2x32xf32>
    %160 = tpu.concatenate %150, %153, %156, %159 in 0 : vector<2x32xf32>, vector<2x32xf32>, vector<2x32xf32>, vector<2x32xf32> -> vector<8x32xf32>
    %161 = vector.broadcast %7 : vector<1x32xf32> to vector<8x32xf32>
    %162 = arith.mulf %160, %161 : vector<8x32xf32>
    %cst_35 = arith.constant dense<0.000000e+00> : vector<8xf32>
    %163 = vector.multi_reduction <add>, %162, %cst_35 [1] : vector<8x32xf32> to vector<8xf32>
    %164 = vector.shape_cast %163 : vector<8xf32> to vector<8x1xf32>
    %165 = vector.broadcast %8 : vector<1x1xf32> to vector<8x1xf32>
    %166 = arith.addf %164, %165 : vector<8x1xf32>
    %167 = arith.negf %166 : vector<8x1xf32>
    %168 = math.exp %167 : vector<8x1xf32>
    %cst_36 = arith.constant 1.000000e+00 : f32
    %169 = vector.broadcast %cst_36 : f32 to vector<8x1xf32>
    %170 = arith.addf %169, %168 : vector<8x1xf32>
    %171 = arith.divf %169, %170 : vector<8x1xf32>
    %172 = vector.broadcast %171 : vector<8x1xf32> to vector<8x32xf32>
    %173 = arith.mulf %172, %160 : vector<8x32xf32>
    %174 = vector.extract_strided_slice %173 {offsets = [0, 0], sizes = [2, 32], strides = [1, 1]} : vector<8x32xf32> to vector<2x32xf32>
    %175 = vector.extract_strided_slice %171 {offsets = [0, 0], sizes = [2, 1], strides = [1, 1]} : vector<8x1xf32> to vector<2x1xf32>
    %176 = vector.extract_strided_slice %173 {offsets = [2, 0], sizes = [2, 32], strides = [1, 1]} : vector<8x32xf32> to vector<2x32xf32>
    %177 = arith.addf %174, %176 : vector<2x32xf32>
    %178 = vector.extract_strided_slice %171 {offsets = [2, 0], sizes = [2, 1], strides = [1, 1]} : vector<8x1xf32> to vector<2x1xf32>
    %179 = arith.addf %175, %178 : vector<2x1xf32>
    %180 = vector.extract_strided_slice %173 {offsets = [4, 0], sizes = [2, 32], strides = [1, 1]} : vector<8x32xf32> to vector<2x32xf32>
    %181 = arith.addf %177, %180 : vector<2x32xf32>
    %182 = vector.extract_strided_slice %171 {offsets = [4, 0], sizes = [2, 1], strides = [1, 1]} : vector<8x1xf32> to vector<2x1xf32>
    %183 = arith.addf %179, %182 : vector<2x1xf32>
    %184 = vector.extract_strided_slice %173 {offsets = [6, 0], sizes = [2, 32], strides = [1, 1]} : vector<8x32xf32> to vector<2x32xf32>
    %185 = arith.addf %181, %184 : vector<2x32xf32>
    %186 = vector.extract_strided_slice %171 {offsets = [6, 0], sizes = [2, 1], strides = [1, 1]} : vector<8x1xf32> to vector<2x1xf32>
    %187 = arith.addf %183, %186 : vector<2x1xf32>
    %188 = tpu.reciprocal %187 {approx = true} : vector<2x1xf32> -> vector<2x1xf32>
    %189 = vector.broadcast %188 : vector<2x1xf32> to vector<2x32xf32>
    %190 = arith.mulf %185, %189 : vector<2x32xf32>
    %cst_37 = arith.constant dense<0.000000e+00> : vector<2x128xf32>
    %191 = tpu.matmul %190, %9, %cst_37 {dimension_numbers = #tpu.dot_dimension_numbers<[1], [0], [0], [1], [0, 0, 1, 1], [], []>} : vector<2x32xf32>, vector<32x128xf32>, vector<2x128xf32> -> vector<2x128xf32>
    %192 = vector.broadcast %10 : vector<1x128xf32> to vector<2x128xf32>
    %193 = arith.addf %191, %192 : vector<2x128xf32>
    %194 = vector.extract_strided_slice %193 {offsets = [0, 0], sizes = [2, 7], strides = [1, 1]} : vector<2x128xf32> to vector<2x7xf32>
    %c0_38 = arith.constant 0 : index
    %c0_39 = arith.constant 0 : index
    %195 = vector.load %arg3[%c0_38, %c0_39] : memref<2x7xf32, #tpu.memory_space<vmem>>, vector<2x7xf32>
    tpu.vector_store %arg3[%c0_38, %c0_39], %194 {strides = array<i32>} : memref<2x7xf32, #tpu.memory_space<vmem>>, vector<2x7xf32>,
    return
  }
}

</mosaic_0001>

<llo_original>
// kernel: clstm_forward.1
$region0: #{clstm_forward.1}
  #allocation0 [shape = 'u32[]', space=smem, size = 0x4, offset = 0x4, fixed_abs, tag = 'smem constant byte address 0x4 - core index']
  #allocation1 [shape = 'u32[144,128]{1,0:T(1,128)}', space=vmem, size = 0x12000, scoped, tag = 'internal scratch']
  %s0 = inlined_call_operand.vmem [shape: bf16[32,2048], index: 0, kind: input, shape index: {}]
  %s1 = inlined_call_operand.vmem [shape: bf16[8,32], index: 1, kind: input, shape index: {}]
  %s2 = inlined_call_operand.vmem [shape: f32[112,128], index: 2, kind: input, shape index: {}]
  %s3 = inlined_call_operand.hbm [shape: f32[2,7], index: 3, kind: output, shape index: {}]
  %s4 = sld [smem:[#allocation0]]
  $region22: #{clstm_forward.1} parent=0
    _
  %s6 = ssub.s32 1, %s4
  %s7 = scalar_select 0, %s6, %s4
  $region1: #{clstm_forward.1} parent=0
    #allocation2 [shape = 'u8[1024]{0}', space=vmem, size = 0x400, scoped, tag = 'output window, operand 0, single buffered']
    #allocation3 [shape = 's32[1]{0}', space=sflag, size = 0x4, scoped, tag = 'scoped memory for clstm_forward.1']
    %8 = vsyncpa [#allocation3], 0
    // Predicated region
    $region2: #{clstm_forward.1} parent=1 // pred_check
      _
    $region3: #{clstm_forward.1} parent=1 // pred_check_branch
      %10 = sbr.rel (0) target = $region5
    $region4: #{clstm_forward.1} parent=1 // pred_region
      _
    $region5: #{clstm_forward.1} parent=1 // pred_fallthru
      _
    // Predicated region
    $region6: #{clstm_forward.1} parent=1 // pred_check
      _
    $region7: #{clstm_forward.1} parent=1 // pred_check_branch
      %12 = sbr.rel (0) target = $region9
    $region8: #{clstm_forward.1} parent=1 // pred_region
      _
    $region9: #{clstm_forward.1} parent=1 // pred_fallthru
      _
    // Predicated region
    $region10: #{clstm_forward.1} parent=1 // pred_check
      _
    $region11: #{clstm_forward.1} parent=1 // pred_check_branch
      %14 = sbr.rel (0) target = $region13
    $region12: #{clstm_forward.1} parent=1 // pred_region
      _
    $region13: #{clstm_forward.1} parent=1 // pred_fallthru
      _
    %v16 = vld [vmem:[%s2] sm:$0xff]
    %v17 = vld [vmem:[%s2 + $0x8] sm:$0xff]
    %v18 = vld [vmem:[%s2 + $0x10] sm:$0x1]
    %v19 = vld [vmem:[%s2 + $0x18] sm:$0xff]
    %v20 = vld [vmem:[%s2 + $0x20] sm:$0xff]
    %v21 = vld [vmem:[%s2 + $0x28] sm:$0xff]
    %v22 = vld [vmem:[%s2 + $0x30] sm:$0xff]
    %v23 = vld [vmem:[%s2 + $0x38] sm:$0xff]
    %v24 = vld [vmem:[%s2 + $0x40] sm:$0x1]
    %v25 = vld [vmem:[%s2 + $0x48] sm:$0xff]
    %v26 = vld [vmem:[%s2 + $0x50] sm:$0xff]
    %v27 = vld [vmem:[%s2 + $0x58] sm:$0xff]
    %v28 = vld [vmem:[%s2 + $0x60] sm:$0xff]
    %v29 = vld [vmem:[%s2 + $0x68] sm:$0x1]
    %v30 = vld [vmem:[%s1] sm:$0xf]
    %v31 = vld [vmem:[%s0] sm:$0xff]
    %v32 = vld [vmem:[%s0 + $0x8] sm:$0xff]
    %v33 = vld [vmem:[%s0 + $0x10] sm:$0xff]
    %v34 = vld [vmem:[%s0 + $0x18] sm:$0xff]
    %v35 = vld [vmem:[%s0 + $0x20] sm:$0xff]
    %v36 = vld [vmem:[%s0 + $0x28] sm:$0xff]
    %v37 = vld [vmem:[%s0 + $0x30] sm:$0xff]
    %v38 = vld [vmem:[%s0 + $0x38] sm:$0xff]
    %v39 = vld [vmem:[%s0 + $0x40] sm:$0xff]
    %v40 = vld [vmem:[%s0 + $0x48] sm:$0xff]
    %v41 = vld [vmem:[%s0 + $0x50] sm:$0xff]
    %v42 = vld [vmem:[%s0 + $0x58] sm:$0xff]
    %v43 = vld [vmem:[%s0 + $0x60] sm:$0xff]
    %v44 = vld [vmem:[%s0 + $0x68] sm:$0xff]
    %v45 = vld [vmem:[%s0 + $0x70] sm:$0xff]
    %v46 = vld [vmem:[%s0 + $0x78] sm:$0xff]
    %v47 = vld [vmem:[%s0 + $0x80] sm:$0xff]
    %v48 = vld [vmem:[%s0 + $0x88] sm:$0xff]
    %v49 = vld [vmem:[%s0 + $0x90] sm:$0xff]
    %v50 = vld [vmem:[%s0 + $0x98] sm:$0xff]
    %v51 = vld [vmem:[%s0 + $0xa0] sm:$0xff]
    %v52 = vld [vmem:[%s0 + $0xa8] sm:$0xff]
    %v53 = vld [vmem:[%s0 + $0xb0] sm:$0xff]
    %v54 = vld [vmem:[%s0 + $0xb8] sm:$0xff]
    %v55 = vld [vmem:[%s0 + $0xc0] sm:$0xff]
    %v56 = vld [vmem:[%s0 + $0xc8] sm:$0xff]
    %v57 = vld [vmem:[%s0 + $0xd0] sm:$0xff]
    %v58 = vld [vmem:[%s0 + $0xd8] sm:$0xff]
    %v59 = vld [vmem:[%s0 + $0xe0] sm:$0xff]
    %v60 = vld [vmem:[%s0 + $0xe8] sm:$0xff]
    %v61 = vld [vmem:[%s0 + $0xf0] sm:$0xff]
    %v62 = vld [vmem:[%s0 + $0xf8] sm:$0xff]
    %64 = vset.pattern.permute.xlu0 0
    %65 = vperm.xlu0 %64, %v23
    %v66 = vpop.permute.xlu0 %65
    %v100 = vunpack.c.l.b16 %v31
    %v101 = vunpack.c.h.b16 %v31
    %v102 = vunpack.c.l.b16 %v32
    %v103 = vunpack.c.h.b16 %v32
    %v104 = vunpack.c.l.b16 %v33
    %v105 = vunpack.c.h.b16 %v33
    %v106 = vunpack.c.l.b16 %v34
    %v107 = vunpack.c.h.b16 %v34
    %v108 = vunpack.c.l.b16 %v35
    %v109 = vunpack.c.h.b16 %v35
    %v110 = vunpack.c.l.b16 %v36
    %v111 = vunpack.c.h.b16 %v36
    %v112 = vunpack.c.l.b16 %v37
    %v113 = vunpack.c.h.b16 %v37
    %v114 = vunpack.c.l.b16 %v38
    %v115 = vunpack.c.h.b16 %v38
    %v116 = vunpack.c.l.b16 %v39
    %v117 = vunpack.c.h.b16 %v39
    %v118 = vunpack.c.l.b16 %v40
    %v119 = vunpack.c.h.b16 %v40
    %v120 = vunpack.c.l.b16 %v41
    %v121 = vunpack.c.h.b16 %v41
    %v122 = vunpack.c.l.b16 %v42
    %v123 = vunpack.c.h.b16 %v42
    %v124 = vunpack.c.l.b16 %v43
    %v125 = vunpack.c.h.b16 %v43
    %v126 = vunpack.c.l.b16 %v44
    %v127 = vunpack.c.h.b16 %v44
    %v128 = vunpack.c.l.b16 %v45
    %v129 = vunpack.c.h.b16 %v45
    %v130 = vunpack.c.l.b16 %v46
    %v131 = vunpack.c.h.b16 %v46
    %v132 = vunpack.c.l.b16 %v47
    %v133 = vunpack.c.h.b16 %v47
    %v134 = vunpack.c.l.b16 %v48
    %v135 = vunpack.c.h.b16 %v48
    %v136 = vunpack.c.l.b16 %v49
    %v137 = vunpack.c.h.b16 %v49
    %v138 = vunpack.c.l.b16 %v50
    %v139 = vunpack.c.h.b16 %v50
    %v140 = vunpack.c.l.b16 %v51
    %v141 = vunpack.c.h.b16 %v51
    %v142 = vunpack.c.l.b16 %v52
    %v143 = vunpack.c.h.b16 %v52
    %v144 = vunpack.c.l.b16 %v53
    %v145 = vunpack.c.h.b16 %v53
    %v146 = vunpack.c.l.b16 %v54
    %v147 = vunpack.c.h.b16 %v54
    %v148 = vunpack.c.l.b16 %v55
    %v149 = vunpack.c.h.b16 %v55
    %v150 = vunpack.c.l.b16 %v56
    %v151 = vunpack.c.h.b16 %v56
    %v152 = vunpack.c.l.b16 %v57
    %v153 = vunpack.c.h.b16 %v57
    %v154 = vunpack.c.l.b16 %v58
    %v155 = vunpack.c.h.b16 %v58
    %v156 = vunpack.c.l.b16 %v59
    %v157 = vunpack.c.h.b16 %v59
    %v158 = vunpack.c.l.b16 %v60
    %v159 = vunpack.c.h.b16 %v60
    %v160 = vunpack.c.l.b16 %v61
    %v161 = vunpack.c.h.b16 %v61
    %v162 = vunpack.c.l.b16 %v62
    %v163 = vunpack.c.h.b16 %v62
    %v164 = vpack.c.b16 %v116, %v100
    %v165 = vpack.c.b16 %v117, %v101
    %v166 = vpack.c.b16 %v118, %v102
    %v167 = vpack.c.b16 %v119, %v103
    %v168 = vpack.c.b16 %v120, %v104
    %v169 = vpack.c.b16 %v121, %v105
    %v170 = vpack.c.b16 %v122, %v106
    %v171 = vpack.c.b16 %v123, %v107
    %v172 = vpack.c.b16 %v124, %v108
    %v173 = vpack.c.b16 %v125, %v109
    %v174 = vpack.c.b16 %v126, %v110
    %v175 = vpack.c.b16 %v127, %v111
    %v176 = vpack.c.b16 %v128, %v112
    %v177 = vpack.c.b16 %v129, %v113
    %v178 = vpack.c.b16 %v130, %v114
    %v179 = vpack.c.b16 %v131, %v115
    %v180 = vpack.c.b16 %v148, %v132
    %v181 = vpack.c.b16 %v149, %v133
    %v182 = vpack.c.b16 %v150, %v134
    %v183 = vpack.c.b16 %v151, %v135
    %v184 = vpack.c.b16 %v152, %v136
    %v185 = vpack.c.b16 %v153, %v137
    %v186 = vpack.c.b16 %v154, %v138
    %v187 = vpack.c.b16 %v155, %v139
    %v188 = vpack.c.b16 %v156, %v140
    %v189 = vpack.c.b16 %v157, %v141
    %v190 = vpack.c.b16 %v158, %v142
    %v191 = vpack.c.b16 %v159, %v143
    %v192 = vpack.c.b16 %v160, %v144
    %v193 = vpack.c.b16 %v161, %v145
    %v194 = vpack.c.b16 %v162, %v146
    %v195 = vpack.c.b16 %v163, %v147
    %vm228 = vcmask 261120
    %v230 = vsel %vm228, %v30, 0
    %232 = vmatprep.subr.bf16.mxu0 %v165
    %233 = vmatpush1.bf16.msra.mxu0 %v164
    %234 = vmatprep.subr.bf16.mxu0 %v181
    %235 = vmatpush1.bf16.msra.mxu0 %v180
    %236 = vmatprep.subr.bf16.mxu0 0
    %237 = vmatpush1.bf16.msra.mxu0 0
    %238 = vmatprep.subr.bf16.mxu0 0
    %239 = vmatpush1.bf16.msra.mxu0 0
    %240 = vmatprep.subr.bf16.mxu0 0
    %241 = vmatpush1.bf16.msra.mxu0 0
    %242 = vmatprep.subr.bf16.mxu0 0
    %243 = vmatpush1.bf16.msra.mxu0 0
    %244 = vmatprep.subr.bf16.mxu0 0
    %245 = vmatpush1.bf16.msra.mxu0 0
    %246 = vmatprep.subr.bf16.mxu0 0
    %247 = vmatpush1.bf16.msra.mxu0 0
    %248 = vmatprep.subr.bf16.mxu0 0
    %249 = vmatpush1.bf16.msra.mxu0 0
    %250 = vmatprep.subr.bf16.mxu0 0
    %251 = vmatpush1.bf16.msra.mxu0 0
    %252 = vmatprep.subr.bf16.mxu0 0
    %253 = vmatpush1.bf16.msra.mxu0 0
    %254 = vmatprep.subr.bf16.mxu0 0
    %255 = vmatpush1.bf16.msra.mxu0 0
    %256 = vmatprep.subr.bf16.mxu0 0
    %257 = vmatpush1.bf16.msra.mxu0 0
    %258 = vmatprep.subr.bf16.mxu0 0
    %259 = vmatpush1.bf16.msra.mxu0 0
    %260 = vmatprep.subr.bf16.mxu0 0
    %261 = vmatpush1.bf16.msra.mxu0 0
    %262 = vmatprep.subr.bf16.mxu0 0
    %263 = vmatpush1.bf16.msra.mxu0 0
    %264 = vmatprep.mubr.bf16.mxu0 0
    %265 = vmatmul.mubr.bf16.gmra.mrb[0].mxu0 %v230
    %v266 = vpop.f32.mrb[0].mxu0
    %v267 = vadd.f32 %v66, %v266
    %v268 = vpop.f32.mrb[0].mxu0
    %v269 = vadd.f32 %v66, %v268
    %v270 = vpop.f32.mrb[0].mxu0
    %v271 = vpop.f32.mrb[0].mxu0
    %272 = vdwg.mxu0
    %273 = vmatprep.subr.bf16.mxu0 %v167
    %274 = vmatpush1.bf16.msra.mxu0 %v166
    %275 = vmatprep.subr.bf16.mxu0 %v183
    %276 = vmatpush1.bf16.msra.mxu0 %v182
    %277 = vmatprep.subr.bf16.mxu0 0
    %278 = vmatpush1.bf16.msra.mxu0 0
    %279 = vmatprep.subr.bf16.mxu0 0
    %280 = vmatpush1.bf16.msra.mxu0 0
    %281 = vmatprep.subr.bf16.mxu0 0
    %282 = vmatpush1.bf16.msra.mxu0 0
    %283 = vmatprep.subr.bf16.mxu0 0
    %284 = vmatpush1.bf16.msra.mxu0 0
    %285 = vmatprep.subr.bf16.mxu0 0
    %286 = vmatpush1.bf16.msra.mxu0 0
    %287 = vmatprep.subr.bf16.mxu0 0
    %288 = vmatpush1.bf16.msra.mxu0 0
    %289 = vmatprep.subr.bf16.mxu0 0
    %290 = vmatpush1.bf16.msra.mxu0 0
    %291 = vmatprep.subr.bf16.mxu0 0
    %292 = vmatpush1.bf16.msra.mxu0 0
    %293 = vmatprep.subr.bf16.mxu0 0
    %294 = vmatpush1.bf16.msra.mxu0 0
    %295 = vmatprep.subr.bf16.mxu0 0
    %296 = vmatpush1.bf16.msra.mxu0 0
    %297 = vmatprep.subr.bf16.mxu0 0
    %298 = vmatpush1.bf16.msra.mxu0 0
    %299 = vmatprep.subr.bf16.mxu0 0
    %300 = vmatpush1.bf16.msra.mxu0 0
    %301 = vmatprep.subr.bf16.mxu0 0
    %302 = vmatpush1.bf16.msra.mxu0 0
    %303 = vmatprep.subr.bf16.mxu0 0
    %304 = vmatpush1.bf16.msra.mxu0 0
    %305 = vmatprep.mubr.bf16.mxu0 0
    %306 = vmatmul.mubr.bf16.gmra.mrb[0].mxu0 %v230
    %v307 = vpop.f32.mrb[0].mxu0
    %v308 = vadd.f32 %v66, %v307
    %v309 = vpop.f32.mrb[0].mxu0
    %v310 = vadd.f32 %v66, %v309
    %v311 = vpop.f32.mrb[0].mxu0
    %v312 = vpop.f32.mrb[0].mxu0
    %313 = vdwg.mxu0
    %314 = vmatprep.subr.bf16.mxu0 %v169
    %315 = vmatpush1.bf16.msra.mxu0 %v168
    %316 = vmatprep.subr.bf16.mxu0 %v185
    %317 = vmatpush1.bf16.msra.mxu0 %v184
    %318 = vmatprep.subr.bf16.mxu0 0
    %319 = vmatpush1.bf16.msra.mxu0 0
    %320 = vmatprep.subr.bf16.mxu0 0
    %321 = vmatpush1.bf16.msra.mxu0 0
    %322 = vmatprep.subr.bf16.mxu0 0
    %323 = vmatpush1.bf16.msra.mxu0 0
    %324 = vmatprep.subr.bf16.mxu0 0
    %325 = vmatpush1.bf16.msra.mxu0 0
    %326 = vmatprep.subr.bf16.mxu0 0
    %327 = vmatpush1.bf16.msra.mxu0 0
    %328 = vmatprep.subr.bf16.mxu0 0
    %329 = vmatpush1.bf16.msra.mxu0 0
    %330 = vmatprep.subr.bf16.mxu0 0
    %331 = vmatpush1.bf16.msra.mxu0 0
    %332 = vmatprep.subr.bf16.mxu0 0
    %333 = vmatpush1.bf16.msra.mxu0 0
    %334 = vmatprep.subr.bf16.mxu0 0
    %335 = vmatpush1.bf16.msra.mxu0 0
    %336 = vmatprep.subr.bf16.mxu0 0
    %337 = vmatpush1.bf16.msra.mxu0 0
    %338 = vmatprep.subr.bf16.mxu0 0
    %339 = vmatpush1.bf16.msra.mxu0 0
    %340 = vmatprep.subr.bf16.mxu0 0
    %341 = vmatpush1.bf16.msra.mxu0 0
    %342 = vmatprep.subr.bf16.mxu0 0
    %343 = vmatpush1.bf16.msra.mxu0 0
    %344 = vmatprep.subr.bf16.mxu0 0
    %345 = vmatpush1.bf16.msra.mxu0 0
    %346 = vmatprep.mubr.bf16.mxu0 0
    %347 = vmatmul.mubr.bf16.gmra.mrb[0].mxu0 %v230
    %v348 = vpop.f32.mrb[0].mxu0
    %v349 = vadd.f32 %v66, %v348
    %v350 = vpop.f32.mrb[0].mxu0
    %v351 = vadd.f32 %v66, %v350
    %v352 = vpop.f32.mrb[0].mxu0
    %v353 = vpop.f32.mrb[0].mxu0
    %354 = vdwg.mxu0
    %355 = vmatprep.subr.bf16.mxu0 %v171
    %356 = vmatpush1.bf16.msra.mxu0 %v170
    %357 = vmatprep.subr.bf16.mxu0 %v187
    %358 = vmatpush1.bf16.msra.mxu0 %v186
    %359 = vmatprep.subr.bf16.mxu0 0
    %360 = vmatpush1.bf16.msra.mxu0 0
    %361 = vmatprep.subr.bf16.mxu0 0
    %362 = vmatpush1.bf16.msra.mxu0 0
    %363 = vmatprep.subr.bf16.mxu0 0
    %364 = vmatpush1.bf16.msra.mxu0 0
    %365 = vmatprep.subr.bf16.mxu0 0
    %366 = vmatpush1.bf16.msra.mxu0 0
    %367 = vmatprep.subr.bf16.mxu0 0
    %368 = vmatpush1.bf16.msra.mxu0 0
    %369 = vmatprep.subr.bf16.mxu0 0
    %370 = vmatpush1.bf16.msra.mxu0 0
    %371 = vmatprep.subr.bf16.mxu0 0
    %372 = vmatpush1.bf16.msra.mxu0 0
    %373 = vmatprep.subr.bf16.mxu0 0
    %374 = vmatpush1.bf16.msra.mxu0 0
    %375 = vmatprep.subr.bf16.mxu0 0
    %376 = vmatpush1.bf16.msra.mxu0 0
    %377 = vmatprep.subr.bf16.mxu0 0
    %378 = vmatpush1.bf16.msra.mxu0 0
    %379 = vmatprep.subr.bf16.mxu0 0
    %380 = vmatpush1.bf16.msra.mxu0 0
    %381 = vmatprep.subr.bf16.mxu0 0
    %382 = vmatpush1.bf16.msra.mxu0 0
    %383 = vmatprep.subr.bf16.mxu0 0
    %384 = vmatpush1.bf16.msra.mxu0 0
    %385 = vmatprep.subr.bf16.mxu0 0
    %386 = vmatpush1.bf16.msra.mxu0 0
    %387 = vmatprep.mubr.bf16.mxu0 0
    %388 = vmatmul.mubr.bf16.gmra.mrb[0].mxu0 %v230
    %v389 = vpop.f32.mrb[0].mxu0
    %v390 = vadd.f32 %v66, %v389
    %v391 = vpop.f32.mrb[0].mxu0
    %v392 = vadd.f32 %v66, %v391
    %v393 = vpop.f32.mrb[0].mxu0
    %v394 = vpop.f32.mrb[0].mxu0
    %395 = vdwg.mxu0
    %396 = vmatprep.subr.bf16.mxu0 %v173
    %397 = vmatpush1.bf16.msra.mxu0 %v172
    %398 = vmatprep.subr.bf16.mxu0 %v189
    %399 = vmatpush1.bf16.msra.mxu0 %v188
    %400 = vmatprep.subr.bf16.mxu0 0
    %401 = vmatpush1.bf16.msra.mxu0 0
    %402 = vmatprep.subr.bf16.mxu0 0
    %403 = vmatpush1.bf16.msra.mxu0 0
    %404 = vmatprep.subr.bf16.mxu0 0
    %405 = vmatpush1.bf16.msra.mxu0 0
    %406 = vmatprep.subr.bf16.mxu0 0
    %407 = vmatpush1.bf16.msra.mxu0 0
    %408 = vmatprep.subr.bf16.mxu0 0
    %409 = vmatpush1.bf16.msra.mxu0 0
    %410 = vmatprep.subr.bf16.mxu0 0
    %411 = vmatpush1.bf16.msra.mxu0 0
    %412 = vmatprep.subr.bf16.mxu0 0
    %413 = vmatpush1.bf16.msra.mxu0 0
    %414 = vmatprep.subr.bf16.mxu0 0
    %415 = vmatpush1.bf16.msra.mxu0 0
    %416 = vmatprep.subr.bf16.mxu0 0
    %417 = vmatpush1.bf16.msra.mxu0 0
    %418 = vmatprep.subr.bf16.mxu0 0
    %419 = vmatpush1.bf16.msra.mxu0 0
    %420 = vmatprep.subr.bf16.mxu0 0
    %421 = vmatpush1.bf16.msra.mxu0 0
    %422 = vmatprep.subr.bf16.mxu0 0
    %423 = vmatpush1.bf16.msra.mxu0 0
    %424 = vmatprep.subr.bf16.mxu0 0
    %425 = vmatpush1.bf16.msra.mxu0 0
    %426 = vmatprep.subr.bf16.mxu0 0
    %427 = vmatpush1.bf16.msra.mxu0 0
    %428 = vmatprep.mubr.bf16.mxu0 0
    %429 = vmatmul.mubr.bf16.gmra.mrb[0].mxu0 %v230
    %v430 = vpop.f32.mrb[0].mxu0
    %v431 = vadd.f32 %v66, %v430
    %v432 = vpop.f32.mrb[0].mxu0
    %v433 = vadd.f32 %v66, %v432
    %v434 = vpop.f32.mrb[0].mxu0
    %v435 = vpop.f32.mrb[0].mxu0
    %436 = vdwg.mxu0
    %437 = vmatprep.subr.bf16.mxu0 %v175
    %438 = vmatpush1.bf16.msra.mxu0 %v174
    %439 = vmatprep.subr.bf16.mxu0 %v191
    %440 = vmatpush1.bf16.msra.mxu0 %v190
    %441 = vmatprep.subr.bf16.mxu0 0
    %442 = vmatpush1.bf16.msra.mxu0 0
    %443 = vmatprep.subr.bf16.mxu0 0
    %444 = vmatpush1.bf16.msra.mxu0 0
    %445 = vmatprep.subr.bf16.mxu0 0
    %446 = vmatpush1.bf16.msra.mxu0 0
    %447 = vmatprep.subr.bf16.mxu0 0
    %448 = vmatpush1.bf16.msra.mxu0 0
    %449 = vmatprep.subr.bf16.mxu0 0
    %450 = vmatpush1.bf16.msra.mxu0 0
    %451 = vmatprep.subr.bf16.mxu0 0
    %452 = vmatpush1.bf16.msra.mxu0 0
    %453 = vmatprep.subr.bf16.mxu0 0
    %454 = vmatpush1.bf16.msra.mxu0 0
    %455 = vmatprep.subr.bf16.mxu0 0
    %456 = vmatpush1.bf16.msra.mxu0 0
    %457 = vmatprep.subr.bf16.mxu0 0
    %458 = vmatpush1.bf16.msra.mxu0 0
    %459 = vmatprep.subr.bf16.mxu0 0
    %460 = vmatpush1.bf16.msra.mxu0 0
    %461 = vmatprep.subr.bf16.mxu0 0
    %462 = vmatpush1.bf16.msra.mxu0 0
    %463 = vmatprep.subr.bf16.mxu0 0
    %464 = vmatpush1.bf16.msra.mxu0 0
    %465 = vmatprep.subr.bf16.mxu0 0
    %466 = vmatpush1.bf16.msra.mxu0 0
    %467 = vmatprep.subr.bf16.mxu0 0
    %468 = vmatpush1.bf16.msra.mxu0 0
    %469 = vmatprep.mubr.bf16.mxu0 0
    %470 = vmatmul.mubr.bf16.gmra.mrb[0].mxu0 %v230
    %v471 = vpop.f32.mrb[0].mxu0
    %v472 = vadd.f32 %v66, %v471
    %v473 = vpop.f32.mrb[0].mxu0
    %v474 = vadd.f32 %v66, %v473
    %v475 = vpop.f32.mrb[0].mxu0
    %v476 = vpop.f32.mrb[0].mxu0
    %477 = vdwg.mxu0
    %478 = vmatprep.subr.bf16.mxu0 %v177
    %479 = vmatpush1.bf16.msra.mxu0 %v176
    %480 = vmatprep.subr.bf16.mxu0 %v193
    %481 = vmatpush1.bf16.msra.mxu0 %v192
    %482 = vmatprep.subr.bf16.mxu0 0
    %483 = vmatpush1.bf16.msra.mxu0 0
    %484 = vmatprep.subr.bf16.mxu0 0
    %485 = vmatpush1.bf16.msra.mxu0 0
    %486 = vmatprep.subr.bf16.mxu0 0
    %487 = vmatpush1.bf16.msra.mxu0 0
    %488 = vmatprep.subr.bf16.mxu0 0
    %489 = vmatpush1.bf16.msra.mxu0 0
    %490 = vmatprep.subr.bf16.mxu0 0
    %491 = vmatpush1.bf16.msra.mxu0 0
    %492 = vmatprep.subr.bf16.mxu0 0
    %493 = vmatpush1.bf16.msra.mxu0 0
    %494 = vmatprep.subr.bf16.mxu0 0
    %495 = vmatpush1.bf16.msra.mxu0 0
    %496 = vmatprep.subr.bf16.mxu0 0
    %497 = vmatpush1.bf16.msra.mxu0 0
    %498 = vmatprep.subr.bf16.mxu0 0
    %499 = vmatpush1.bf16.msra.mxu0 0
    %500 = vmatprep.subr.bf16.mxu0 0
    %501 = vmatpush1.bf16.msra.mxu0 0
    %502 = vmatprep.subr.bf16.mxu0 0
    %503 = vmatpush1.bf16.msra.mxu0 0
    %504 = vmatprep.subr.bf16.mxu0 0
    %505 = vmatpush1.bf16.msra.mxu0 0
    %506 = vmatprep.subr.bf16.mxu0 0
    %507 = vmatpush1.bf16.msra.mxu0 0
    %508 = vmatprep.subr.bf16.mxu0 0
    %509 = vmatpush1.bf16.msra.mxu0 0
    %510 = vmatprep.mubr.bf16.mxu0 0
    %511 = vmatmul.mubr.bf16.gmra.mrb[0].mxu0 %v230
    %v512 = vpop.f32.mrb[0].mxu0
    %v513 = vadd.f32 %v66, %v512
    %v514 = vpop.f32.mrb[0].mxu0
    %v515 = vadd.f32 %v66, %v514
    %v516 = vpop.f32.mrb[0].mxu0
    %v517 = vpop.f32.mrb[0].mxu0
    %518 = vdwg.mxu0
    %519 = vmatprep.subr.bf16.mxu0 %v179
    %520 = vmatpush1.bf16.msra.mxu0 %v178
    %521 = vmatprep.subr.bf16.mxu0 %v195
    %522 = vmatpush1.bf16.msra.mxu0 %v194
    %523 = vmatprep.subr.bf16.mxu0 0
    %524 = vmatpush1.bf16.msra.mxu0 0
    %525 = vmatprep.subr.bf16.mxu0 0
    %526 = vmatpush1.bf16.msra.mxu0 0
    %527 = vmatprep.subr.bf16.mxu0 0
    %528 = vmatpush1.bf16.msra.mxu0 0
    %529 = vmatprep.subr.bf16.mxu0 0
    %530 = vmatpush1.bf16.msra.mxu0 0
    %531 = vmatprep.subr.bf16.mxu0 0
    %532 = vmatpush1.bf16.msra.mxu0 0
    %533 = vmatprep.subr.bf16.mxu0 0
    %534 = vmatpush1.bf16.msra.mxu0 0
    %535 = vmatprep.subr.bf16.mxu0 0
    %536 = vmatpush1.bf16.msra.mxu0 0
    %537 = vmatprep.subr.bf16.mxu0 0
    %538 = vmatpush1.bf16.msra.mxu0 0
    %539 = vmatprep.subr.bf16.mxu0 0
    %540 = vmatpush1.bf16.msra.mxu0 0
    %541 = vmatprep.subr.bf16.mxu0 0
    %542 = vmatpush1.bf16.msra.mxu0 0
    %543 = vmatprep.subr.bf16.mxu0 0
    %544 = vmatpush1.bf16.msra.mxu0 0
    %545 = vmatprep.subr.bf16.mxu0 0
    %546 = vmatpush1.bf16.msra.mxu0 0
    %547 = vmatprep.subr.bf16.mxu0 0
    %548 = vmatpush1.bf16.msra.mxu0 0
    %549 = vmatprep.subr.bf16.mxu0 0
    %550 = vmatpush1.bf16.msra.mxu0 0
    %551 = vmatprep.mubr.bf16.mxu0 0
    %552 = vmatmul.mubr.bf16.gmra.mrb[0].mxu0 %v230
    %v553 = vpop.f32.mrb[0].mxu0
    %v554 = vadd.f32 %v66, %v553
    %v555 = vpop.f32.mrb[0].mxu0
    %v556 = vadd.f32 %v66, %v555
    %v557 = vpop.f32.mrb[0].mxu0
    %v558 = vpop.f32.mrb[0].mxu0
    %559 = vdwg.mxu0
    %v560 = vxor.u32 %v267, 2147483648
    %v561 = vxor.u32 %v269, 2147483648
    %v562 = vxor.u32 %v308, 2147483648
    %v563 = vxor.u32 %v310, 2147483648
    %v564 = vxor.u32 %v349, 2147483648
    %v565 = vxor.u32 %v351, 2147483648
    %v566 = vxor.u32 %v390, 2147483648
    %v567 = vxor.u32 %v392, 2147483648
    %v568 = vxor.u32 %v431, 2147483648
    %v569 = vxor.u32 %v433, 2147483648
    %v570 = vxor.u32 %v472, 2147483648
    %v571 = vxor.u32 %v474, 2147483648
    %v572 = vxor.u32 %v513, 2147483648
    %v573 = vxor.u32 %v515, 2147483648
    %v574 = vxor.u32 %v554, 2147483648
    %v575 = vxor.u32 %v556, 2147483648
    %v576 = vmul.f32 %v560, 1.442695
    %v577 = vpow.pop %v576
    %v578 = vmul.f32 %v561, 1.442695
    %v579 = vpow.pop %v578
    %v580 = vmul.f32 %v562, 1.442695
    %v581 = vpow.pop %v580
    %v582 = vmul.f32 %v563, 1.442695
    %v583 = vpow.pop %v582
    %v584 = vmul.f32 %v564, 1.442695
    %v585 = vpow.pop %v584
    %v586 = vmul.f32 %v565, 1.442695
    %v587 = vpow.pop %v586
    %v588 = vmul.f32 %v566, 1.442695
    %v589 = vpow.pop %v588
    %v590 = vmul.f32 %v567, 1.442695
    %v591 = vpow.pop %v590
    %v592 = vmul.f32 %v568, 1.442695
    %v593 = vpow.pop %v592
    %v594 = vmul.f32 %v569, 1.442695
    %v595 = vpow.pop %v594
    %v596 = vmul.f32 %v570, 1.442695
    %v597 = vpow.pop %v596
    %v598 = vmul.f32 %v571, 1.442695
    %v599 = vpow.pop %v598
    %v600 = vmul.f32 %v572, 1.442695
    %v601 = vpow.pop %v600
    %v602 = vmul.f32 %v573, 1.442695
    %v603 = vpow.pop %v602
    %v604 = vmul.f32 %v574, 1.442695
    %v605 = vpow.pop %v604
    %v606 = vmul.f32 %v575, 1.442695
    %v607 = vpow.pop %v606
    %v608 = vadd.f32 %v577, 1.0
    %v609 = vadd.f32 %v579, 1.0
    %v610 = vadd.f32 %v581, 1.0
    %v611 = vadd.f32 %v583, 1.0
    %v612 = vadd.f32 %v585, 1.0
    %v613 = vadd.f32 %v587, 1.0
    %v614 = vadd.f32 %v589, 1.0
    %v615 = vadd.f32 %v591, 1.0
    %v616 = vadd.f32 %v593, 1.0
    %v617 = vadd.f32 %v595, 1.0
    %v618 = vadd.f32 %v597, 1.0
    %v619 = vadd.f32 %v599, 1.0
    %v620 = vadd.f32 %v601, 1.0
    %v621 = vadd.f32 %v603, 1.0
    %v622 = vadd.f32 %v605, 1.0
    %v623 = vadd.f32 %v607, 1.0
    %v624 = vrcp.pop %v608
    %v625 = vmul.f32 1.0, %v624
    %v626 = vrcp.pop %v609
    %v627 = vmul.f32 1.0, %v626
    %v628 = vrcp.pop %v610
    %v629 = vmul.f32 1.0, %v628
    %v630 = vrcp.pop %v611
    %v631 = vmul.f32 1.0, %v630
    %v632 = vrcp.pop %v612
    %v633 = vmul.f32 1.0, %v632
    %v634 = vrcp.pop %v613
    %v635 = vmul.f32 1.0, %v634
    %v636 = vrcp.pop %v614
    %v637 = vmul.f32 1.0, %v636
    %v638 = vrcp.pop %v615
    %v639 = vmul.f32 1.0, %v638
    %v640 = vrcp.pop %v616
    %v641 = vmul.f32 1.0, %v640
    %v642 = vrcp.pop %v617
    %v643 = vmul.f32 1.0, %v642
    %v644 = vrcp.pop %v618
    %v645 = vmul.f32 1.0, %v644
    %v646 = vrcp.pop %v619
    %v647 = vmul.f32 1.0, %v646
    %v648 = vrcp.pop %v620
    %v649 = vmul.f32 1.0, %v648
    %v650 = vrcp.pop %v621
    %v651 = vmul.f32 1.0, %v650
    %v652 = vrcp.pop %v622
    %v653 = vmul.f32 1.0, %v652
    %v654 = vrcp.pop %v623
    %v655 = vmul.f32 1.0, %v654
    %v656 = vmul.f32 %v267, %v625
    %v657 = vmul.f32 %v269, %v627
    %v658 = vmul.f32 %v308, %v629
    %v659 = vmul.f32 %v310, %v631
    %v660 = vmul.f32 %v349, %v633
    %v661 = vmul.f32 %v351, %v635
    %v662 = vmul.f32 %v390, %v637
    %v663 = vmul.f32 %v392, %v639
    %v664 = vmul.f32 %v431, %v641
    %v665 = vmul.f32 %v433, %v643
    %v666 = vmul.f32 %v472, %v645
    %v667 = vmul.f32 %v474, %v647
    %v668 = vmul.f32 %v513, %v649
    %v669 = vmul.f32 %v515, %v651
    %v670 = vmul.f32 %v554, %v653
    %v671 = vmul.f32 %v556, %v655
    %v672 = vadd.f32 %v656, %v657
    %673 = vadd.xlane.f32.xlu0 %v672
    %v674 = vpop.xlane.xlu0 %673
    %v675 = vadd.f32 %v658, %v659
    %676 = vadd.xlane.f32.xlu0 %v675
    %v677 = vpop.xlane.xlu0 %676
    %v678 = vadd.f32 %v660, %v661
    %679 = vadd.xlane.f32.xlu0 %v678
    %v680 = vpop.xlane.xlu0 %679
    %v681 = vadd.f32 %v662, %v663
    %682 = vadd.xlane.f32.xlu0 %v681
    %v683 = vpop.xlane.xlu0 %682
    %v684 = vadd.f32 %v664, %v665
    %685 = vadd.xlane.f32.xlu0 %v684
    %v686 = vpop.xlane.xlu0 %685
    %v687 = vadd.f32 %v666, %v667
    %688 = vadd.xlane.f32.xlu0 %v687
    %v689 = vpop.xlane.xlu0 %688
    %v690 = vadd.f32 %v668, %v669
    %691 = vadd.xlane.f32.xlu0 %v690
    %v692 = vpop.xlane.xlu0 %691
    %v693 = vadd.f32 %v670, %v671
    %694 = vadd.xlane.f32.xlu0 %v693
    %v695 = vpop.xlane.xlu0 %694
    %vm696 = vcmask 7168
    %v697 = vsel %vm696, %v674, %v677
    %vm698 = vcmask 15360
    %v699 = vsel %vm698, %v697, %v680
    %vm700 = vcmask 23552
    %v701 = vsel %vm700, %v699, %v683
    %vm702 = vcmask 31744
    %v703 = vsel %vm702, %v701, %v686
    %vm704 = vcmask 39936
    %v705 = vsel %vm704, %v703, %v689
    %vm706 = vcmask 48128
    %v707 = vsel %vm706, %v705, %v692
    %vm708 = vcmask 56320
    %v709 = vsel %vm708, %v707, %v695
    %v710 = vmul.f32 %v709, 0.00390625
    %v711 = vlaneseq
    %v712 = vshrl.u32 %v711, 7
    %v713 = vlaneseq
    %v714 = vand.u32 %v713, 127
    %vm715 = vcmp.eq.s32.totalorder %v712, %v714
    %v716 = vsel %vm715, 1, 0
    %v717 = vcvt.s32.f32 %v716
    %v718 = vlaneseq
    %v719 = vshrl.u32 %v718, 7
    %v720 = vsub.s32 0, %v719
    %v721 = vrot.slane %v710, %v720
    %723 = vbcast.lane.b32.xlu0 %v721, 256
    %v724 = vpop.permute.xlu0 %723
    %v725 = vlaneseq
    %v726 = vshrl.u32 %v725, 7
    %v727 = vsub.s32 1, %v726
    %v728 = vrot.slane %v710, %v727
    %730 = vbcast.lane.b32.xlu0 %v728, 256
    %v731 = vpop.permute.xlu0 %730
    %v732 = vlaneseq
    %v733 = vshrl.u32 %v732, 7
    %v734 = vsub.s32 2, %v733
    %v735 = vrot.slane %v710, %v734
    %737 = vbcast.lane.b32.xlu0 %v735, 256
    %v738 = vpop.permute.xlu0 %737
    %v739 = vlaneseq
    %v740 = vshrl.u32 %v739, 7
    %v741 = vsub.s32 3, %v740
    %v742 = vrot.slane %v710, %v741
    %744 = vbcast.lane.b32.xlu0 %v742, 256
    %v745 = vpop.permute.xlu0 %744
    %v746 = vlaneseq
    %v747 = vshrl.u32 %v746, 7
    %v748 = vsub.s32 4, %v747
    %v749 = vrot.slane %v710, %v748
    %751 = vbcast.lane.b32.xlu0 %v749, 256
    %v752 = vpop.permute.xlu0 %751
    %v753 = vlaneseq
    %v754 = vshrl.u32 %v753, 7
    %v755 = vsub.s32 5, %v754
    %v756 = vrot.slane %v710, %v755
    %758 = vbcast.lane.b32.xlu0 %v756, 256
    %v759 = vpop.permute.xlu0 %758
    %v760 = vlaneseq
    %v761 = vshrl.u32 %v760, 7
    %v762 = vsub.s32 6, %v761
    %v763 = vrot.slane %v710, %v762
    %765 = vbcast.lane.b32.xlu0 %v763, 256
    %v766 = vpop.permute.xlu0 %765
    %v767 = vlaneseq
    %v768 = vshrl.u32 %v767, 7
    %v769 = vsub.s32 7, %v768
    %v770 = vrot.slane %v710, %v769
    %772 = vbcast.lane.b32.xlu0 %v770, 256
    %v773 = vpop.permute.xlu0 %772
    %v775 = vcombine.high %v717, %v717
    %v777 = vunpack.c.l.s4 1966171168
    %v778 = vunpack.c.0.s8 %v777
    %v779 = vlaneseq
    %v780 = vshrl.u32 %v779, 7
    %v781 = vsub.s32 %v778, %v780
    %v782 = vrot.slane %v717, %v781
    %v784 = vunpack.c.l.s4 1966171168
    %v785 = vunpack.c.0.s8 %v784
    %v786 = vlaneseq
    %v787 = vshrl.u32 %v786, 7
    %v788 = vsub.s32 %v785, %v787
    %v789 = vrot.slane %v775, %v788
    %v790 = vcombine.high %v782, %v782
    %v791 = vcombine.high %v789, %v789
    %v793 = vunpack.c.l.s4 1966171168
    %v794 = vunpack.c.0.s8 %v793
    %v795 = vlaneseq
    %v796 = vshrl.u32 %v795, 7
    %v797 = vsub.s32 %v794, %v796
    %v798 = vrot.slane %v782, %v797
    %v800 = vunpack.c.l.s4 1966171168
    %v801 = vunpack.c.0.s8 %v800
    %v802 = vlaneseq
    %v803 = vshrl.u32 %v802, 7
    %v804 = vsub.s32 %v801, %v803
    %v805 = vrot.slane %v789, %v804
    %v807 = vunpack.c.l.s4 1966171168
    %v808 = vunpack.c.0.s8 %v807
    %v809 = vlaneseq
    %v810 = vshrl.u32 %v809, 7
    %v811 = vsub.s32 %v808, %v810
    %v812 = vrot.slane %v790, %v811
    %v814 = vunpack.c.l.s4 1966171168
    %v815 = vunpack.c.0.s8 %v814
    %v816 = vlaneseq
    %v817 = vshrl.u32 %v816, 7
    %v818 = vsub.s32 %v815, %v817
    %v819 = vrot.slane %v791, %v818
    %v820 = vcombine.high %v798, %v798
    %v821 = vcombine.high %v805, %v805
    %v822 = vcombine.high %v812, %v812
    %v823 = vcombine.high %v819, %v819
    %v824 = vlaneseq
    %v825 = vshrl.u32 %v824, 7
    %v826 = vsub.s32 0, %v825
    %v827 = vrot.slane %v798, %v826
    %v828 = vlaneseq
    %v829 = vshrl.u32 %v828, 7
    %v830 = vsub.s32 0, %v829
    %v831 = vrot.slane %v812, %v830
    %v832 = vlaneseq
    %v833 = vshrl.u32 %v832, 7
    %v834 = vsub.s32 0, %v833
    %v835 = vrot.slane %v820, %v834
    %v836 = vlaneseq
    %v837 = vshrl.u32 %v836, 7
    %v838 = vsub.s32 0, %v837
    %v839 = vrot.slane %v822, %v838
    %v840 = vlaneseq
    %v841 = vshrl.u32 %v840, 7
    %v842 = vsub.s32 0, %v841
    %v843 = vrot.slane %v805, %v842
    %v844 = vlaneseq
    %v845 = vshrl.u32 %v844, 7
    %v846 = vsub.s32 0, %v845
    %v847 = vrot.slane %v819, %v846
    %v848 = vlaneseq
    %v849 = vshrl.u32 %v848, 7
    %v850 = vsub.s32 0, %v849
    %v851 = vrot.slane %v821, %v850
    %v852 = vlaneseq
    %v853 = vshrl.u32 %v852, 7
    %v854 = vsub.s32 0, %v853
    %v855 = vrot.slane %v823, %v854
    %v864 = vmul.f32 %v724, %v827
    %v865 = vmul.f32 %v731, %v831
    %v866 = vmul.f32 %v738, %v835
    %v867 = vmul.f32 %v745, %v839
    %v868 = vmul.f32 %v752, %v843
    %v869 = vmul.f32 %v759, %v847
    %v870 = vmul.f32 %v766, %v851
    %v871 = vmul.f32 %v773, %v855
    %vm872 = vcmask 64512
    %v873 = vsel %vm872, %v864, 0.0
    %v874 = vsel %vm872, %v865, 0.0
    %v875 = vadd.f32 %v873, %v874
    %v876 = vsel %vm872, %v866, 0.0
    %v877 = vadd.f32 %v875, %v876
    %v878 = vsel %vm872, %v867, 0.0
    %v879 = vadd.f32 %v877, %v878
    %v880 = vsel %vm872, %v868, 0.0
    %v881 = vadd.f32 %v879, %v880
    %v882 = vsel %vm872, %v869, 0.0
    %v883 = vadd.f32 %v881, %v882
    %v884 = vsel %vm872, %v870, 0.0
    %v885 = vadd.f32 %v883, %v884
    %v886 = vsel %vm872, %v871, 0.0
    %v887 = vadd.f32 %v885, %v886
    %v889 = vrot.slane %v887, 6
    %v891 = vrot.slane %v887, 2
    %vm893 = vcmask 1041408
    %v894 = vsel %vm893, %v889, %v891
    %vm895 = vcmask 1043456
    %v896 = vsel %vm895, %v894, %v889
    %vm897 = vcmask 1045504
    %v898 = vsel %vm897, %v896, %v891
    %v900 = vsel %vm872, %v898, 0
    %902 = vmatprep.subr.mxu0 0.0
    %903 = vmatpush1.msra.mxu0 %v17
    %904 = vmatprep.subr.mxu0 0.0
    %905 = vmatpush1.msra.mxu0 0.0
    %906 = vmatprep.subr.mxu0 0.0
    %907 = vmatpush1.msra.mxu0 0.0
    %908 = vmatprep.subr.mxu0 0.0
    %909 = vmatpush1.msra.mxu0 0.0
    %910 = vmatprep.subr.mxu0 0.0
    %911 = vmatpush1.msra.mxu0 0.0
    %912 = vmatprep.subr.mxu0 0.0
    %913 = vmatpush1.msra.mxu0 0.0
    %914 = vmatprep.subr.mxu0 0.0
    %915 = vmatpush1.msra.mxu0 0.0
    %916 = vmatprep.subr.mxu0 0.0
    %917 = vmatpush1.msra.mxu0 0.0
    %918 = vmatprep.subr.mxu0 0.0
    %919 = vmatpush1.msra.mxu0 0.0
    %920 = vmatprep.subr.mxu0 0.0
    %921 = vmatpush1.msra.mxu0 0.0
    %922 = vmatprep.subr.mxu0 0.0
    %923 = vmatpush1.msra.mxu0 0.0
    %924 = vmatprep.subr.mxu0 0.0
    %925 = vmatpush1.msra.mxu0 0.0
    %926 = vmatprep.subr.mxu0 0.0
    %927 = vmatpush1.msra.mxu0 0.0
    %928 = vmatprep.subr.mxu0 0.0
    %929 = vmatpush1.msra.mxu0 0.0
    %930 = vmatprep.subr.mxu0 0.0
    %931 = vmatpush1.msra.mxu0 0.0
    %932 = vmatprep.subr.mxu0 0.0
    %933 = vmatpush1.msra.mxu0 0.0
    %934 = vmatprep.subr.mxu0 0.0
    %935 = vmatpush1.msra.mxu0 0.0
    %936 = vmatprep.subr.mxu0 0.0
    %937 = vmatpush1.msra.mxu0 0.0
    %938 = vmatprep.subr.mxu0 0.0
    %939 = vmatpush1.msra.mxu0 0.0
    %940 = vmatprep.subr.mxu0 0.0
    %941 = vmatpush1.msra.mxu0 0.0
    %942 = vmatprep.subr.mxu0 0.0
    %943 = vmatpush1.msra.mxu0 0.0
    %944 = vmatprep.subr.mxu0 0.0
    %945 = vmatpush1.msra.mxu0 0.0
    %946 = vmatprep.subr.mxu0 0.0
    %947 = vmatpush1.msra.mxu0 0.0
    %948 = vmatprep.subr.mxu0 0.0
    %949 = vmatpush1.msra.mxu0 0.0
    %950 = vmatprep.subr.mxu0 0.0
    %951 = vmatpush1.msra.mxu0 0.0
    %952 = vmatprep.subr.mxu0 0.0
    %953 = vmatpush1.msra.mxu0 0.0
    %954 = vmatprep.subr.mxu0 0.0
    %955 = vmatpush1.msra.mxu0 0.0
    %956 = vmatprep.subr.mxu0 0.0
    %957 = vmatpush1.msra.mxu0 0.0
    %958 = vmatprep.subr.mxu0 0.0
    %959 = vmatpush1.msra.mxu0 0.0
    %960 = vmatprep.subr.mxu0 0.0
    %961 = vmatpush1.msra.mxu0 0.0
    %962 = vmatprep.subr.mxu0 0.0
    %963 = vmatpush1.msra.mxu0 0.0
    %964 = vmatprep.subr.mxu0 0.0
    %965 = vmatpush1.msra.mxu0 0.0
    %966 = vmatprep.mubr.f32.mxu0 0.0
    %967 = vmatmul.mubr.f32.gmra.mrb[0].mxu0 %v900
    %v968 = vpop.f32.mrb[0].mxu0
    %v969 = vadd.f32 0.0, %v968
    %v970 = vpop.f32.mrb[0].mxu0
    %971 = vdwg.mxu0
    %v972 = vsel %vm872, %v887, 0
    %974 = vmatprep.subr.mxu0 0.0
    %975 = vmatpush1.msra.mxu0 %v16
    %976 = vmatprep.subr.mxu0 0.0
    %977 = vmatpush1.msra.mxu0 0.0
    %978 = vmatprep.subr.mxu0 0.0
    %979 = vmatpush1.msra.mxu0 0.0
    %980 = vmatprep.subr.mxu0 0.0
    %981 = vmatpush1.msra.mxu0 0.0
    %982 = vmatprep.subr.mxu0 0.0
    %983 = vmatpush1.msra.mxu0 0.0
    %984 = vmatprep.subr.mxu0 0.0
    %985 = vmatpush1.msra.mxu0 0.0
    %986 = vmatprep.subr.mxu0 0.0
    %987 = vmatpush1.msra.mxu0 0.0
    %988 = vmatprep.subr.mxu0 0.0
    %989 = vmatpush1.msra.mxu0 0.0
    %990 = vmatprep.subr.mxu0 0.0
    %991 = vmatpush1.msra.mxu0 0.0
    %992 = vmatprep.subr.mxu0 0.0
    %993 = vmatpush1.msra.mxu0 0.0
    %994 = vmatprep.subr.mxu0 0.0
    %995 = vmatpush1.msra.mxu0 0.0
    %996 = vmatprep.subr.mxu0 0.0
    %997 = vmatpush1.msra.mxu0 0.0
    %998 = vmatprep.subr.mxu0 0.0
    %999 = vmatpush1.msra.mxu0 0.0
    %1000 = vmatprep.subr.mxu0 0.0
    %1001 = vmatpush1.msra.mxu0 0.0
    %1002 = vmatprep.subr.mxu0 0.0
    %1003 = vmatpush1.msra.mxu0 0.0
    %1004 = vmatprep.subr.mxu0 0.0
    %1005 = vmatpush1.msra.mxu0 0.0
    %1006 = vmatprep.subr.mxu0 0.0
    %1007 = vmatpush1.msra.mxu0 0.0
    %1008 = vmatprep.subr.mxu0 0.0
    %1009 = vmatpush1.msra.mxu0 0.0
    %1010 = vmatprep.subr.mxu0 0.0
    %1011 = vmatpush1.msra.mxu0 0.0
    %1012 = vmatprep.subr.mxu0 0.0
    %1013 = vmatpush1.msra.mxu0 0.0
    %1014 = vmatprep.subr.mxu0 0.0
    %1015 = vmatpush1.msra.mxu0 0.0
    %1016 = vmatprep.subr.mxu0 0.0
    %1017 = vmatpush1.msra.mxu0 0.0
    %1018 = vmatprep.subr.mxu0 0.0
    %1019 = vmatpush1.msra.mxu0 0.0
    %1020 = vmatprep.subr.mxu0 0.0
    %1021 = vmatpush1.msra.mxu0 0.0
    %1022 = vmatprep.subr.mxu0 0.0
    %1023 = vmatpush1.msra.mxu0 0.0
    %1024 = vmatprep.subr.mxu0 0.0
    %1025 = vmatpush1.msra.mxu0 0.0
    %1026 = vmatprep.subr.mxu0 0.0
    %1027 = vmatpush1.msra.mxu0 0.0
    %1028 = vmatprep.subr.mxu0 0.0
    %1029 = vmatpush1.msra.mxu0 0.0
    %1030 = vmatprep.subr.mxu0 0.0
    %1031 = vmatpush1.msra.mxu0 0.0
    %1032 = vmatprep.subr.mxu0 0.0
    %1033 = vmatpush1.msra.mxu0 0.0
    %1034 = vmatprep.subr.mxu0 0.0
    %1035 = vmatpush1.msra.mxu0 0.0
    %1036 = vmatprep.subr.mxu0 0.0
    %1037 = vmatpush1.msra.mxu0 0.0
    %1038 = vmatprep.mubr.f32.mxu0 0.0
    %1039 = vmatmul.mubr.f32.gmra.mrb[0].mxu0 %v972
    %v1040 = vpop.f32.mrb[0].mxu0
    %v1041 = vadd.f32 %v969, %v1040
    %v1042 = vpop.f32.mrb[0].mxu0
    %1043 = vdwg.mxu0
    %v1044 = vlaneseq
    %v1045 = vshrl.u32 %v1044, 7
    %v1046 = vsub.s32 0, %v1045
    %v1047 = vrot.slane %v18, %v1046
    %v1048 = vadd.f32 %v1041, %v1047
    %v1050 = vsel %vm228, 0.0, 0
    %1052 = vmatprep.subr.mxu0 0.0
    %1053 = vmatpush1.msra.mxu0 %v19
    %1054 = vmatprep.subr.mxu0 0.0
    %1055 = vmatpush1.msra.mxu0 %v20
    %1056 = vmatprep.subr.mxu0 0.0
    %1057 = vmatpush1.msra.mxu0 %v21
    %1058 = vmatprep.subr.mxu0 0.0
    %1059 = vmatpush1.msra.mxu0 %v22
    %1060 = vmatprep.subr.mxu0 0.0
    %1061 = vmatpush1.msra.mxu0 0.0
    %1062 = vmatprep.subr.mxu0 0.0
    %1063 = vmatpush1.msra.mxu0 0.0
    %1064 = vmatprep.subr.mxu0 0.0
    %1065 = vmatpush1.msra.mxu0 0.0
    %1066 = vmatprep.subr.mxu0 0.0
    %1067 = vmatpush1.msra.mxu0 0.0
    %1068 = vmatprep.subr.mxu0 0.0
    %1069 = vmatpush1.msra.mxu0 0.0
    %1070 = vmatprep.subr.mxu0 0.0
    %1071 = vmatpush1.msra.mxu0 0.0
    %1072 = vmatprep.subr.mxu0 0.0
    %1073 = vmatpush1.msra.mxu0 0.0
    %1074 = vmatprep.subr.mxu0 0.0
    %1075 = vmatpush1.msra.mxu0 0.0
    %1076 = vmatprep.subr.mxu0 0.0
    %1077 = vmatpush1.msra.mxu0 0.0
    %1078 = vmatprep.subr.mxu0 0.0
    %1079 = vmatpush1.msra.mxu0 0.0
    %1080 = vmatprep.subr.mxu0 0.0
    %1081 = vmatpush1.msra.mxu0 0.0
    %1082 = vmatprep.subr.mxu0 0.0
    %1083 = vmatpush1.msra.mxu0 0.0
    %1084 = vmatprep.subr.mxu0 0.0
    %1085 = vmatpush1.msra.mxu0 0.0
    %1086 = vmatprep.subr.mxu0 0.0
    %1087 = vmatpush1.msra.mxu0 0.0
    %1088 = vmatprep.subr.mxu0 0.0
    %1089 = vmatpush1.msra.mxu0 0.0
    %1090 = vmatprep.subr.mxu0 0.0
    %1091 = vmatpush1.msra.mxu0 0.0
    %1092 = vmatprep.subr.mxu0 0.0
    %1093 = vmatpush1.msra.mxu0 0.0
    %1094 = vmatprep.subr.mxu0 0.0
    %1095 = vmatpush1.msra.mxu0 0.0
    %1096 = vmatprep.subr.mxu0 0.0
    %1097 = vmatpush1.msra.mxu0 0.0
    %1098 = vmatprep.subr.mxu0 0.0
    %1099 = vmatpush1.msra.mxu0 0.0
    %1100 = vmatprep.subr.mxu0 0.0
    %1101 = vmatpush1.msra.mxu0 0.0
    %1102 = vmatprep.subr.mxu0 0.0
    %1103 = vmatpush1.msra.mxu0 0.0
    %1104 = vmatprep.subr.mxu0 0.0
    %1105 = vmatpush1.msra.mxu0 0.0
    %1106 = vmatprep.subr.mxu0 0.0
    %1107 = vmatpush1.msra.mxu0 0.0
    %1108 = vmatprep.subr.mxu0 0.0
    %1109 = vmatpush1.msra.mxu0 0.0
    %1110 = vmatprep.subr.mxu0 0.0
    %1111 = vmatpush1.msra.mxu0 0.0
    %1112 = vmatprep.subr.mxu0 0.0
    %1113 = vmatpush1.msra.mxu0 0.0
    %1114 = vmatprep.subr.mxu0 0.0
    %1115 = vmatpush1.msra.mxu0 0.0
    %1116 = vmatprep.mubr.f32.mxu0 0.0
    %1117 = vmatmul.mubr.f32.gmra.mrb[0].mxu0 %v1050
    %v1118 = vpop.f32.mrb[0].mxu0
    %v1119 = vadd.f32 0.0, %v1118
    %v1120 = vpop.f32.mrb[0].mxu0
    %1121 = vdwg.mxu0
    %v1122 = vadd.f32 %v1048, %v1119
    %v1123 = vxor.u32 %v1122, 2147483648
    %v1124 = vmul.f32 %v1123, 1.442695
    %v1125 = vpow.pop %v1124
    %v1126 = vadd.f32 %v1125, 1.0
    %v1127 = vrcp.pop %v1126
    %v1128 = vmul.f32 1.0, %v1127
    %v1129 = vtanh.pop %v1122
    %v1130 = vmul.f32 %v1128, 0.0
    %1132 = vrot.lane.b32.xlu0 %v1129, 32
    %v1133 = vpop.permute.xlu0 %1132
    %v1135 = vmul.f32 %v1128, %v1133
    %1137 = vrot.lane.b32.xlu0 %v1135, 32
    %v1138 = vpop.permute.xlu0 %1137
    %v1140 = vadd.f32 %v1130, %v1138
    %v1141 = vtanh.pop %v1140
    %1143 = vrot.lane.b32.xlu0 %v1141, 32
    %v1144 = vpop.permute.xlu0 %1143
    %v1146 = vmul.f32 %v1128, %v1144
    %1148 = vrot.lane.b32.xlu0 %v1146, 64
    %v1149 = vpop.permute.xlu0 %1148
    %v1150 = vsel %vm228, %v1149, 0
    %1152 = vmatprep.subr.mxu0 0.0
    %1153 = vmatpush1.msra.mxu0 %v19
    %1154 = vmatprep.subr.mxu0 0.0
    %1155 = vmatpush1.msra.mxu0 %v20
    %1156 = vmatprep.subr.mxu0 0.0
    %1157 = vmatpush1.msra.mxu0 %v21
    %1158 = vmatprep.subr.mxu0 0.0
    %1159 = vmatpush1.msra.mxu0 %v22
    %1160 = vmatprep.subr.mxu0 0.0
    %1161 = vmatpush1.msra.mxu0 0.0
    %1162 = vmatprep.subr.mxu0 0.0
    %1163 = vmatpush1.msra.mxu0 0.0
    %1164 = vmatprep.subr.mxu0 0.0
    %1165 = vmatpush1.msra.mxu0 0.0
    %1166 = vmatprep.subr.mxu0 0.0
    %1167 = vmatpush1.msra.mxu0 0.0
    %1168 = vmatprep.subr.mxu0 0.0
    %1169 = vmatpush1.msra.mxu0 0.0
    %1170 = vmatprep.subr.mxu0 0.0
    %1171 = vmatpush1.msra.mxu0 0.0
    %1172 = vmatprep.subr.mxu0 0.0
    %1173 = vmatpush1.msra.mxu0 0.0
    %1174 = vmatprep.subr.mxu0 0.0
    %1175 = vmatpush1.msra.mxu0 0.0
    %1176 = vmatprep.subr.mxu0 0.0
    %1177 = vmatpush1.msra.mxu0 0.0
    %1178 = vmatprep.subr.mxu0 0.0
    %1179 = vmatpush1.msra.mxu0 0.0
    %1180 = vmatprep.subr.mxu0 0.0
    %1181 = vmatpush1.msra.mxu0 0.0
    %1182 = vmatprep.subr.mxu0 0.0
    %1183 = vmatpush1.msra.mxu0 0.0
    %1184 = vmatprep.subr.mxu0 0.0
    %1185 = vmatpush1.msra.mxu0 0.0
    %1186 = vmatprep.subr.mxu0 0.0
    %1187 = vmatpush1.msra.mxu0 0.0
    %1188 = vmatprep.subr.mxu0 0.0
    %1189 = vmatpush1.msra.mxu0 0.0
    %1190 = vmatprep.subr.mxu0 0.0
    %1191 = vmatpush1.msra.mxu0 0.0
    %1192 = vmatprep.subr.mxu0 0.0
    %1193 = vmatpush1.msra.mxu0 0.0
    %1194 = vmatprep.subr.mxu0 0.0
    %1195 = vmatpush1.msra.mxu0 0.0
    %1196 = vmatprep.subr.mxu0 0.0
    %1197 = vmatpush1.msra.mxu0 0.0
    %1198 = vmatprep.subr.mxu0 0.0
    %1199 = vmatpush1.msra.mxu0 0.0
    %1200 = vmatprep.subr.mxu0 0.0
    %1201 = vmatpush1.msra.mxu0 0.0
    %1202 = vmatprep.subr.mxu0 0.0
    %1203 = vmatpush1.msra.mxu0 0.0
    %1204 = vmatprep.subr.mxu0 0.0
    %1205 = vmatpush1.msra.mxu0 0.0
    %1206 = vmatprep.subr.mxu0 0.0
    %1207 = vmatpush1.msra.mxu0 0.0
    %1208 = vmatprep.subr.mxu0 0.0
    %1209 = vmatpush1.msra.mxu0 0.0
    %1210 = vmatprep.subr.mxu0 0.0
    %1211 = vmatpush1.msra.mxu0 0.0
    %1212 = vmatprep.subr.mxu0 0.0
    %1213 = vmatpush1.msra.mxu0 0.0
    %1214 = vmatprep.subr.mxu0 0.0
    %1215 = vmatpush1.msra.mxu0 0.0
    %1216 = vmatprep.mubr.f32.mxu0 0.0
    %1217 = vmatmul.mubr.f32.gmra.mrb[0].mxu0 %v1150
    %v1218 = vpop.f32.mrb[0].mxu0
    %v1219 = vadd.f32 0.0, %v1218
    %v1220 = vpop.f32.mrb[0].mxu0
    %1221 = vdwg.mxu0
    %v1223 = vrot.slane %v1219, 6
    %v1225 = vadd.f32 %v1048, %v1223
    %v1226 = vxor.u32 %v1225, 2147483648
    %v1227 = vmul.f32 %v1226, 1.442695
    %v1228 = vpow.pop %v1227
    %v1229 = vadd.f32 %v1228, 1.0
    %v1230 = vrcp.pop %v1229
    %v1231 = vmul.f32 1.0, %v1230
    %v1232 = vtanh.pop %v1225
    %v1234 = vrot.slane %v1140, 6
    %v1236 = vmul.f32 %v1231, %v1234
    %1238 = vrot.lane.b32.xlu0 %v1232, 32
    %v1239 = vpop.permute.xlu0 %1238
    %v1241 = vmul.f32 %v1231, %v1239
    %1243 = vrot.lane.b32.xlu0 %v1241, 32
    %v1244 = vpop.permute.xlu0 %1243
    %v1246 = vadd.f32 %v1236, %v1244
    %v1247 = vtanh.pop %v1246
    %1249 = vrot.lane.b32.xlu0 %v1247, 32
    %v1250 = vpop.permute.xlu0 %1249
    %v1252 = vmul.f32 %v1231, %v1250
    %v1254 = vrot.slane %v1252, 2
    %1255 = vrot.lane.b32.xlu0 %v1254, 64
    %v1256 = vpop.permute.xlu0 %1255
    %v1257 = vsel %vm228, %v1256, 0
    %1259 = vmatprep.subr.mxu0 0.0
    %1260 = vmatpush1.msra.mxu0 %v19
    %1261 = vmatprep.subr.mxu0 0.0
    %1262 = vmatpush1.msra.mxu0 %v20
    %1263 = vmatprep.subr.mxu0 0.0
    %1264 = vmatpush1.msra.mxu0 %v21
    %1265 = vmatprep.subr.mxu0 0.0
    %1266 = vmatpush1.msra.mxu0 %v22
    %1267 = vmatprep.subr.mxu0 0.0
    %1268 = vmatpush1.msra.mxu0 0.0
    %1269 = vmatprep.subr.mxu0 0.0
    %1270 = vmatpush1.msra.mxu0 0.0
    %1271 = vmatprep.subr.mxu0 0.0
    %1272 = vmatpush1.msra.mxu0 0.0
    %1273 = vmatprep.subr.mxu0 0.0
    %1274 = vmatpush1.msra.mxu0 0.0
    %1275 = vmatprep.subr.mxu0 0.0
    %1276 = vmatpush1.msra.mxu0 0.0
    %1277 = vmatprep.subr.mxu0 0.0
    %1278 = vmatpush1.msra.mxu0 0.0
    %1279 = vmatprep.subr.mxu0 0.0
    %1280 = vmatpush1.msra.mxu0 0.0
    %1281 = vmatprep.subr.mxu0 0.0
    %1282 = vmatpush1.msra.mxu0 0.0
    %1283 = vmatprep.subr.mxu0 0.0
    %1284 = vmatpush1.msra.mxu0 0.0
    %1285 = vmatprep.subr.mxu0 0.0
    %1286 = vmatpush1.msra.mxu0 0.0
    %1287 = vmatprep.subr.mxu0 0.0
    %1288 = vmatpush1.msra.mxu0 0.0
    %1289 = vmatprep.subr.mxu0 0.0
    %1290 = vmatpush1.msra.mxu0 0.0
    %1291 = vmatprep.subr.mxu0 0.0
    %1292 = vmatpush1.msra.mxu0 0.0
    %1293 = vmatprep.subr.mxu0 0.0
    %1294 = vmatpush1.msra.mxu0 0.0
    %1295 = vmatprep.subr.mxu0 0.0
    %1296 = vmatpush1.msra.mxu0 0.0
    %1297 = vmatprep.subr.mxu0 0.0
    %1298 = vmatpush1.msra.mxu0 0.0
    %1299 = vmatprep.subr.mxu0 0.0
    %1300 = vmatpush1.msra.mxu0 0.0
    %1301 = vmatprep.subr.mxu0 0.0
    %1302 = vmatpush1.msra.mxu0 0.0
    %1303 = vmatprep.subr.mxu0 0.0
    %1304 = vmatpush1.msra.mxu0 0.0
    %1305 = vmatprep.subr.mxu0 0.0
    %1306 = vmatpush1.msra.mxu0 0.0
    %1307 = vmatprep.subr.mxu0 0.0
    %1308 = vmatpush1.msra.mxu0 0.0
    %1309 = vmatprep.subr.mxu0 0.0
    %1310 = vmatpush1.msra.mxu0 0.0
    %1311 = vmatprep.subr.mxu0 0.0
    %1312 = vmatpush1.msra.mxu0 0.0
    %1313 = vmatprep.subr.mxu0 0.0
    %1314 = vmatpush1.msra.mxu0 0.0
    %1315 = vmatprep.subr.mxu0 0.0
    %1316 = vmatpush1.msra.mxu0 0.0
    %1317 = vmatprep.subr.mxu0 0.0
    %1318 = vmatpush1.msra.mxu0 0.0
    %1319 = vmatprep.subr.mxu0 0.0
    %1320 = vmatpush1.msra.mxu0 0.0
    %1321 = vmatprep.subr.mxu0 0.0
    %1322 = vmatpush1.msra.mxu0 0.0
    %1323 = vmatprep.mubr.f32.mxu0 0.0
    %1324 = vmatmul.mubr.f32.gmra.mrb[0].mxu0 %v1257
    %v1325 = vpop.f32.mrb[0].mxu0
    %v1326 = vadd.f32 0.0, %v1325
    %v1327 = vpop.f32.mrb[0].mxu0
    %1328 = vdwg.mxu0
    %v1330 = vrot.slane %v1326, 4
    %v1332 = vadd.f32 %v1048, %v1330
    %v1333 = vxor.u32 %v1332, 2147483648
    %v1334 = vmul.f32 %v1333, 1.442695
    %v1335 = vpow.pop %v1334
    %v1336 = vadd.f32 %v1335, 1.0
    %v1337 = vrcp.pop %v1336
    %v1338 = vmul.f32 1.0, %v1337
    %v1339 = vtanh.pop %v1332
    %v1341 = vrot.slane %v1246, 6
    %v1343 = vmul.f32 %v1338, %v1341
    %1345 = vrot.lane.b32.xlu0 %v1339, 32
    %v1346 = vpop.permute.xlu0 %1345
    %v1348 = vmul.f32 %v1338, %v1346
    %1350 = vrot.lane.b32.xlu0 %v1348, 32
    %v1351 = vpop.permute.xlu0 %1350
    %v1353 = vadd.f32 %v1343, %v1351
    %v1354 = vtanh.pop %v1353
    %1356 = vrot.lane.b32.xlu0 %v1354, 32
    %v1357 = vpop.permute.xlu0 %1356
    %v1359 = vmul.f32 %v1338, %v1357
    %v1361 = vrot.slane %v1359, 4
    %1362 = vrot.lane.b32.xlu0 %v1361, 64
    %v1363 = vpop.permute.xlu0 %1362
    %v1364 = vsel %vm228, %v1363, 0
    %1366 = vmatprep.subr.mxu0 0.0
    %1367 = vmatpush1.msra.mxu0 %v19
    %1368 = vmatprep.subr.mxu0 0.0
    %1369 = vmatpush1.msra.mxu0 %v20
    %1370 = vmatprep.subr.mxu0 0.0
    %1371 = vmatpush1.msra.mxu0 %v21
    %1372 = vmatprep.subr.mxu0 0.0
    %1373 = vmatpush1.msra.mxu0 %v22
    %1374 = vmatprep.subr.mxu0 0.0
    %1375 = vmatpush1.msra.mxu0 0.0
    %1376 = vmatprep.subr.mxu0 0.0
    %1377 = vmatpush1.msra.mxu0 0.0
    %1378 = vmatprep.subr.mxu0 0.0
    %1379 = vmatpush1.msra.mxu0 0.0
    %1380 = vmatprep.subr.mxu0 0.0
    %1381 = vmatpush1.msra.mxu0 0.0
    %1382 = vmatprep.subr.mxu0 0.0
    %1383 = vmatpush1.msra.mxu0 0.0
    %1384 = vmatprep.subr.mxu0 0.0
    %1385 = vmatpush1.msra.mxu0 0.0
    %1386 = vmatprep.subr.mxu0 0.0
    %1387 = vmatpush1.msra.mxu0 0.0
    %1388 = vmatprep.subr.mxu0 0.0
    %1389 = vmatpush1.msra.mxu0 0.0
    %1390 = vmatprep.subr.mxu0 0.0
    %1391 = vmatpush1.msra.mxu0 0.0
    %1392 = vmatprep.subr.mxu0 0.0
    %1393 = vmatpush1.msra.mxu0 0.0
    %1394 = vmatprep.subr.mxu0 0.0
    %1395 = vmatpush1.msra.mxu0 0.0
    %1396 = vmatprep.subr.mxu0 0.0
    %1397 = vmatpush1.msra.mxu0 0.0
    %1398 = vmatprep.subr.mxu0 0.0
    %1399 = vmatpush1.msra.mxu0 0.0
    %1400 = vmatprep.subr.mxu0 0.0
    %1401 = vmatpush1.msra.mxu0 0.0
    %1402 = vmatprep.subr.mxu0 0.0
    %1403 = vmatpush1.msra.mxu0 0.0
    %1404 = vmatprep.subr.mxu0 0.0
    %1405 = vmatpush1.msra.mxu0 0.0
    %1406 = vmatprep.subr.mxu0 0.0
    %1407 = vmatpush1.msra.mxu0 0.0
    %1408 = vmatprep.subr.mxu0 0.0
    %1409 = vmatpush1.msra.mxu0 0.0
    %1410 = vmatprep.subr.mxu0 0.0
    %1411 = vmatpush1.msra.mxu0 0.0
    %1412 = vmatprep.subr.mxu0 0.0
    %1413 = vmatpush1.msra.mxu0 0.0
    %1414 = vmatprep.subr.mxu0 0.0
    %1415 = vmatpush1.msra.mxu0 0.0
    %1416 = vmatprep.subr.mxu0 0.0
    %1417 = vmatpush1.msra.mxu0 0.0
    %1418 = vmatprep.subr.mxu0 0.0
    %1419 = vmatpush1.msra.mxu0 0.0
    %1420 = vmatprep.subr.mxu0 0.0
    %1421 = vmatpush1.msra.mxu0 0.0
    %1422 = vmatprep.subr.mxu0 0.0
    %1423 = vmatpush1.msra.mxu0 0.0
    %1424 = vmatprep.subr.mxu0 0.0
    %1425 = vmatpush1.msra.mxu0 0.0
    %1426 = vmatprep.subr.mxu0 0.0
    %1427 = vmatpush1.msra.mxu0 0.0
    %1428 = vmatprep.subr.mxu0 0.0
    %1429 = vmatpush1.msra.mxu0 0.0
    %1430 = vmatprep.mubr.f32.mxu0 0.0
    %1431 = vmatmul.mubr.f32.gmra.mrb[0].mxu0 %v1364
    %v1432 = vpop.f32.mrb[0].mxu0
    %v1433 = vadd.f32 0.0, %v1432
    %v1434 = vpop.f32.mrb[0].mxu0
    %1435 = vdwg.mxu0
    %v1437 = vrot.slane %v1433, 2
    %v1439 = vadd.f32 %v1048, %v1437
    %v1440 = vxor.u32 %v1439, 2147483648
    %v1441 = vmul.f32 %v1440, 1.442695
    %v1442 = vpow.pop %v1441
    %v1443 = vadd.f32 %v1442, 1.0
    %v1444 = vrcp.pop %v1443
    %v1445 = vmul.f32 1.0, %v1444
    %v1446 = vtanh.pop %v1439
    %v1448 = vrot.slane %v1353, 6
    %v1450 = vmul.f32 %v1445, %v1448
    %1452 = vrot.lane.b32.xlu0 %v1446, 32
    %v1453 = vpop.permute.xlu0 %1452
    %v1455 = vmul.f32 %v1445, %v1453
    %1457 = vrot.lane.b32.xlu0 %v1455, 32
    %v1458 = vpop.permute.xlu0 %1457
    %v1460 = vadd.f32 %v1450, %v1458
    %v1461 = vtanh.pop %v1460
    %1463 = vrot.lane.b32.xlu0 %v1461, 32
    %v1464 = vpop.permute.xlu0 %1463
    %v1466 = vmul.f32 %v1445, %v1464
    %v1469 = vrot.slane %v1466, 6
    %1470 = vrot.lane.b32.xlu0 %v1469, 64
    %v1471 = vpop.permute.xlu0 %1470
    %vm1473 = vcmask 130048
    %v1474 = vsel %vm1473, %v1149, %v1471
    %1475 = vrot.lane.b32.xlu0 %v1252, 64
    %v1476 = vpop.permute.xlu0 %1475
    %v1478 = vrot.slane %v1359, 2
    %1479 = vrot.lane.b32.xlu0 %v1478, 64
    %v1480 = vpop.permute.xlu0 %1479
    %v1482 = vsel %vm1473, %v1476, %v1480
    %1483 = vrot.lane.b32.xlu0 %v1359, 64
    %v1484 = vpop.permute.xlu0 %1483
    %v1486 = vrot.slane %v1252, 6
    %1487 = vrot.lane.b32.xlu0 %v1486, 64
    %v1488 = vpop.permute.xlu0 %1487
    %v1490 = vsel %vm1473, %v1484, %v1488
    %1491 = vrot.lane.b32.xlu0 %v1466, 64
    %v1492 = vpop.permute.xlu0 %1491
    %v1494 = vrot.slane %v1146, 2
    %1495 = vrot.lane.b32.xlu0 %v1494, 64
    %v1496 = vpop.permute.xlu0 %1495
    %v1498 = vsel %vm1473, %v1492, %v1496
    %v1499 = vsel %vm893, %v1474, %v1482
    %v1500 = vsel %vm895, %v1499, %v1490
    %v1501 = vsel %vm897, %v1500, %v1498
    %v1502 = vlaneseq
    %v1503 = vshrl.u32 %v1502, 7
    %v1504 = vsub.s32 0, %v1503
    %v1505 = vrot.slane %v24, %v1504
    %v1506 = vmul.f32 %v1501, %v1505
    %v1507 = vsel %vm228, %v1506, 0.0
    %1508 = vadd.xlane.f32.xlu0 %v1507
    %v1509 = vpop.xlane.xlu0 %1508
    %v1510 = vadd.f32 %v1509, %v1505
    %v1511 = vxor.u32 %v1510, 2147483648
    %v1512 = vmul.f32 %v1511, 1.442695
    %v1513 = vpow.pop %v1512
    %v1514 = vadd.f32 %v1513, 1.0
    %v1515 = vrcp.pop %v1514
    %v1516 = vmul.f32 1.0, %v1515
    %1518 = vset.pattern.permute.xlu0 32
    %1519 = vperm.xlu0 %1518, %v1516
    %v1520 = vpop.permute.xlu0 %1519
    %v1522 = vmul.f32 %v1520, %v1501
    %v1524 = vrot.slane %v1522, 2
    %v1526 = vadd.f32 %v1522, %v1524
    %v1527 = vrot.slane %v1516, 2
    %v1529 = vadd.f32 %v1516, %v1527
    %v1530 = vrot.slane %v1522, 4
    %v1532 = vadd.f32 %v1526, %v1530
    %v1533 = vrot.slane %v1516, 4
    %v1535 = vadd.f32 %v1529, %v1533
    %v1536 = vrot.slane %v1522, 6
    %v1538 = vadd.f32 %v1532, %v1536
    %v1539 = vrot.slane %v1516, 6
    %v1541 = vadd.f32 %v1535, %v1539
    %v1542 = vrcp.pop %v1541
    %1544 = vset.pattern.permute.xlu0 32
    %1545 = vperm.xlu0 %1544, %v1542
    %v1546 = vpop.permute.xlu0 %1545
    %v1548 = vmul.f32 %v1538, %v1546
    %v1549 = vlaneseq
    %v1550 = vshrl.u32 %v1549, 7
    %v1551 = vsub.s32 0, %v1550
    %v1552 = vrot.slane %v29, %v1551
    %v1554 = vsel %vm228, %v1548, 0
    %1556 = vmatprep.subr.mxu0 0.0
    %1557 = vmatpush1.msra.mxu0 %v25
    %1558 = vmatprep.subr.mxu0 0.0
    %1559 = vmatpush1.msra.mxu0 %v26
    %1560 = vmatprep.subr.mxu0 0.0
    %1561 = vmatpush1.msra.mxu0 %v27
    %1562 = vmatprep.subr.mxu0 0.0
    %1563 = vmatpush1.msra.mxu0 %v28
    %1564 = vmatprep.subr.mxu0 0.0
    %1565 = vmatpush1.msra.mxu0 0.0
    %1566 = vmatprep.subr.mxu0 0.0
    %1567 = vmatpush1.msra.mxu0 0.0
    %1568 = vmatprep.subr.mxu0 0.0
    %1569 = vmatpush1.msra.mxu0 0.0
    %1570 = vmatprep.subr.mxu0 0.0
    %1571 = vmatpush1.msra.mxu0 0.0
    %1572 = vmatprep.subr.mxu0 0.0
    %1573 = vmatpush1.msra.mxu0 0.0
    %1574 = vmatprep.subr.mxu0 0.0
    %1575 = vmatpush1.msra.mxu0 0.0
    %1576 = vmatprep.subr.mxu0 0.0
    %1577 = vmatpush1.msra.mxu0 0.0
    %1578 = vmatprep.subr.mxu0 0.0
    %1579 = vmatpush1.msra.mxu0 0.0
    %1580 = vmatprep.subr.mxu0 0.0
    %1581 = vmatpush1.msra.mxu0 0.0
    %1582 = vmatprep.subr.mxu0 0.0
    %1583 = vmatpush1.msra.mxu0 0.0
    %1584 = vmatprep.subr.mxu0 0.0
    %1585 = vmatpush1.msra.mxu0 0.0
    %1586 = vmatprep.subr.mxu0 0.0
    %1587 = vmatpush1.msra.mxu0 0.0
    %1588 = vmatprep.subr.mxu0 0.0
    %1589 = vmatpush1.msra.mxu0 0.0
    %1590 = vmatprep.subr.mxu0 0.0
    %1591 = vmatpush1.msra.mxu0 0.0
    %1592 = vmatprep.subr.mxu0 0.0
    %1593 = vmatpush1.msra.mxu0 0.0
    %1594 = vmatprep.subr.mxu0 0.0
    %1595 = vmatpush1.msra.mxu0 0.0
    %1596 = vmatprep.subr.mxu0 0.0
    %1597 = vmatpush1.msra.mxu0 0.0
    %1598 = vmatprep.subr.mxu0 0.0
    %1599 = vmatpush1.msra.mxu0 0.0
    %1600 = vmatprep.subr.mxu0 0.0
    %1601 = vmatpush1.msra.mxu0 0.0
    %1602 = vmatprep.subr.mxu0 0.0
    %1603 = vmatpush1.msra.mxu0 0.0
    %1604 = vmatprep.subr.mxu0 0.0
    %1605 = vmatpush1.msra.mxu0 0.0
    %1606 = vmatprep.subr.mxu0 0.0
    %1607 = vmatpush1.msra.mxu0 0.0
    %1608 = vmatprep.subr.mxu0 0.0
    %1609 = vmatpush1.msra.mxu0 0.0
    %1610 = vmatprep.subr.mxu0 0.0
    %1611 = vmatpush1.msra.mxu0 0.0
    %1612 = vmatprep.subr.mxu0 0.0
    %1613 = vmatpush1.msra.mxu0 0.0
    %1614 = vmatprep.subr.mxu0 0.0
    %1615 = vmatpush1.msra.mxu0 0.0
    %1616 = vmatprep.subr.mxu0 0.0
    %1617 = vmatpush1.msra.mxu0 0.0
    %1618 = vmatprep.subr.mxu0 0.0
    %1619 = vmatpush1.msra.mxu0 0.0
    %1620 = vmatprep.mubr.f32.mxu0 0.0
    %1621 = vmatmul.mubr.f32.gmra.mrb[0].mxu0 %v1554
    %v1622 = vpop.f32.mrb[0].mxu0
    %v1623 = vadd.f32 %v1552, %v1622
    %v1624 = vpop.f32.mrb[0].mxu0
    %1625 = vdwg.mxu0
    %vm1626 = vcmask 50176
    %1627 = vst.msk [vmem:[#allocation2] sm:$0x3] %vm1626, %v1623
    // Predicated region
    $region14: #{clstm_forward.1} parent=1 // pred_check
      _
    $region15: #{clstm_forward.1} parent=1 // pred_check_branch
      %1629 = sbr.rel (0) target = $region17
    $region16: #{clstm_forward.1} parent=1 // pred_region
      %s1631 = ssub.s32 32, 32
      %1632 = vsyncadd [#allocation3], %s1631
      %s1634 = sshll.u32 [#allocation2], 4
      %s1635 = int_to_ptr.vmem [resolvable:$true] %s1634
      %1637 = dma.vmem_to_hbm [thread:$0]  %s1635, 32, %s3, [#allocation3]
    $region17: #{clstm_forward.1} parent=1 // pred_fallthru
      _
    // Predicated region
    $region18: #{clstm_forward.1} parent=1 // pred_check
      _
    $region19: #{clstm_forward.1} parent=1 // pred_check_branch
      %1639 = sbr.rel (0) target = $region21
    $region20: #{clstm_forward.1} parent=1 // pred_region
      %1640 = dma.done [#allocation3], 32
    $region21: #{clstm_forward.1} parent=1 // pred_fallthru
      _
    %1641 = vsyncpa [#allocation3], 1

</llo_original>
